<compile_context>
chip_gen: v7x
topology: tpu7x:2x2x1
jax: 0.10.0
libtpu: 0.0.40
codegen_flags: <defaults>
</compile_context>

<pallas_src>
import functools
import math

import jax
import jax.numpy as jnp
from jax.experimental import pallas as pl
from jax.experimental.pallas import tpu as pltpu

LANE = 128  # TPU lane width


def rnn_kernel(x_ref, wih0_ref, wih_rest_ref, whh_ref, b_ref, wfc_ref, bfc_ref,
               out_ref, buf_a, buf_b, *, seq_len, rows, unroll):
    """Stacked tanh-RNN forward for one lane-packed batch tile.

    x_ref        : (1, T*R, Ipk)   time-major, lane-packed input tile (bf16)
    wih0_ref     : (Ipk, Hp)       layer-0 input weights, block-diag, bf16
    wih_rest_ref : (Lr, Hp, Hp)    layer>0 input weights, block-diag, bf16
    whh_ref      : (L, Hp, Hp)     hidden-hidden weights, block-diag, bf16
    b_ref        : (L, 1, Hp)      lane-tiled combined bias b_ih + b_hh (f32)
    wfc_ref      : (Hp, Opk)       fc weight, block-diag, bf16
    bfc_ref      : (1, Opk)        lane-tiled fc bias (f32)
    out_ref      : (1, R, Opk)     packed output tile (f32)
    buf_a, buf_b : VMEM (T*R, Hp)  ping-pong projected / hidden sequence (f32)
    """
    T, R = seq_len, rows
    L = whh_ref.shape[0]
    Hp = buf_a.shape[-1]
    f32 = jnp.float32

    # ---- layer 0: batched input projection for ALL timesteps, bias folded in ----
    buf_a[...] = (jnp.dot(x_ref[0], wih0_ref[...], preferred_element_type=f32)
                  + b_ref[0])

    bufs = (buf_a, buf_b)

    def run_layer(buf, whh, store_seq):
        """Serial recurrence h_t = tanh(proj_t + h_{t-1} @ W_hh).

        Reads the pre-projected sequence from `buf`; writes the hidden sequence
        back into `buf` only when the next layer needs it (store_seq).
        """
        h = jnp.zeros((R, Hp), f32)
        if T <= 32:
            # Small T: full static unroll keeps everything visible to the
            # LLO scheduler with bounded code size.
            for t in range(T):
                sl = pl.ds(t * R, R)
                h = jnp.tanh(buf[sl, :]
                             + jnp.dot(h.astype(whh.dtype), whh,
                                       preferred_element_type=f32))
                if store_seq:
                    buf[sl, :] = h        # safe: read precedes write
        else:
            # Long sequences: bound vreg live ranges / code size.
            def body(t, h):
                start = pl.multiple_of(t * R, R)
                sl = pl.ds(start, R)
                h = jnp.tanh(buf[sl, :]
                             + jnp.dot(h.astype(whh.dtype), whh,
                                       preferred_element_type=f32))
                if store_seq:
                    buf[sl, :] = h
                return h
            h = jax.lax.fori_loop(0, T, body, h, unroll=unroll)
        return h

    h_last = run_layer(buf_a, whh_ref[0], store_seq=(L > 1))

    # ---- layers 1..L-1: batched projection of the previous layer's sequence ----
    src = buf_a
    for l in range(1, L):
        dst = bufs[l % 2]                 # ping-pong: stream matmul result to VMEM
        dst[...] = (jnp.dot(src[...].astype(wih_rest_ref.dtype),
                            wih_rest_ref[l - 1],
                            preferred_element_type=f32) + b_ref[l])
        h_last = run_layer(dst, whh_ref[l], store_seq=(l < L - 1))
        src = dst

    # ---- fc on the last timestep of the last layer (lane-dense packed output) ----
    out_ref[0] = (jnp.dot(h_last.astype(wfc_ref.dtype), wfc_ref[...],
                          preferred_element_type=f32) + bfc_ref[...])


# ----------------------------- parameter packing -----------------------------

def _round_up(n, m):
    return ((n + m - 1) // m) * m


def _pad_axis(a, axis, mult):
    pad = (-a.shape[axis]) % mult
    if pad == 0:
        return a
    pads = [(0, 0)] * a.ndim
    pads[axis] = (0, pad)
    return jnp.pad(a, pads)


def _block_diag(w, p):
    """(..., a, b) -> (..., p*a, p*b) block-diagonal with p copies of w."""
    if p == 1:
        return w
    a, b = w.shape[-2], w.shape[-1]
    eye = jnp.eye(p, dtype=w.dtype)
    out = jnp.einsum('ij,...ab->...iajb', eye, w)
    return out.reshape(*w.shape[:-2], p * a, p * b)


def pack_params(params, p, oslot, mxu_dtype=jnp.bfloat16):
    """Block-diag lane-pack p independent copies of the weights (exact),
    lane-pad to multiples of 128, cast MXU operands to bf16.  Biases stay f32."""
    O = params["wfc"].shape[-1]

    wih0 = _pad_axis(_block_diag(params["wih0"], p), -1, LANE)              # (p*I, Hp)
    wih_rest = _pad_axis(_pad_axis(_block_diag(params["wih_rest"], p), -1, LANE), -2, LANE)
    whh = _pad_axis(_pad_axis(_block_diag(params["whh"], p), -1, LANE), -2, LANE)
    b = _pad_axis(jnp.tile(params["b"], (1, 1, p)), -1, LANE)               # (L, 1, Hp)

    wfc_g = jnp.pad(params["wfc"], ((0, 0), (0, oslot - O)))                # (H, oslot)
    bfc_g = jnp.pad(params["bfc"], ((0, 0), (0, oslot - O)))                # (1, oslot)
    wfc = _pad_axis(_pad_axis(_block_diag(wfc_g, p), -2, LANE), -1, LANE)   # (Hp, Opk)
    bfc = _pad_axis(jnp.tile(bfc_g, (1, p)), -1, LANE)                      # (1, Opk)

    cast = lambda a: a.astype(mxu_dtype)
    return {"wih0": cast(wih0), "wih_rest": cast(wih_rest), "whh": cast(whh),
            "b": b.astype(jnp.float32), "wfc": cast(wfc),
            "bfc": bfc.astype(jnp.float32)}


# --------------------------------- wrapper -----------------------------------

def inflation_rnn_forward(x, params, *, num_batch_tiles=1,
                          mxu_dtype=jnp.bfloat16):
    """x: (batch, seq, input_size) float32, batch_first like the PyTorch module.

    num_batch_tiles: 1 for v5e/v6e (single TensorCore); 2 on v7x when the batch
    is large enough that halving the tile doesn't starve the MXU.
    """
    B, T, I = x.shape
    H = params["whh"].shape[-1]
    O = params["wfc"].shape[-1]
    L = params["whh"].shape[0]
    Lr = params["wih_rest"].shape[0]   # TODO(synk): for num_layers==1 this is a
    # tiny dummy (1,H,H) block that is still DMA'd; harmless at these sizes.

    NB = num_batch_tiles
    assert B % NB == 0, "batch must be divisible by the number of batch tiles"
    TB = B // NB

    # Lane-pack factor: largest p <= 128//H that divides the batch tile.
    p = 1
    if H < LANE:
        for cand in range(min(LANE // H, TB), 0, -1):
            if TB % cand == 0:
                p = cand
                break
    R = TB // p                                    # rows per recurrence matmul

    # Per-group fc slot width so the packed output is lane-dense when possible.
    oslot = LANE // p if (LANE % p == 0 and LANE // p >= O) else O

    pp = pack_params(params, p, oslot, mxu_dtype)
    Ipk = pp["wih0"].shape[0]
    Hp = pp["whh"].shape[-1]
    Opk = pp["wfc"].shape[-1]

    # Pack batch sub-groups along lanes and make each tile a time-major slab:
    #   x_pk[nb, t*R + r, g*I:(g+1)*I] == x[nb*TB + g*R + r, t, :]
    # Single fused XLA reshape/transpose (+ bf16 cast halves input DMA bytes).
    # TODO(synk): fold this reorder into the kernel's layer-0 projection at
    # large B*T*I to avoid the extra HBM pass over x.
    x_pk = (x.reshape(NB, p, R, T, I)
              .transpose(0, 3, 2, 1, 4)
              .reshape(NB, T * R, p * I)
              .astype(mxu_dtype))

    # --- VMEM budget (matters on v7x's 64 MiB): only raise the limit if needed.
    itm = jnp.dtype(mxu_dtype).itemsize
    wbytes = (pp["wih0"].size + pp["wih_rest"].size
              + pp["whh"].size + pp["wfc"].size) * itm
    est_bytes = (2 * T * R * Hp * 4            # two f32 ping-pong seq buffers
                 + 2 * T * R * Ipk * itm       # double-buffered x tile
                 + 2 * R * Opk * 4             # double-buffered out tile
                 + 2 * wbytes                  # weights (default double-buffered)
                 + 2 * (pp["b"].size + pp["bfc"].size) * 4)
    cparams = dict(dimension_semantics=("parallel",))   # v7x megacore over tiles
    if est_bytes > 30 * 1024 * 1024:
        cparams["vmem_limit_bytes"] = int(est_bytes * 1.25)

    kernel = functools.partial(rnn_kernel, seq_len=T, rows=R, unroll=4)

    # NOTE: at real hidden sizes add pipeline_mode=pl.Buffered(1) to the weight
    # BlockSpecs below (constant index maps, fetched once) to halve their VMEM.
    out = pl.pallas_call(
        kernel,
        out_shape=jax.ShapeDtypeStruct((NB, R, Opk), jnp.float32),
        grid=(NB,),
        in_specs=[
            pl.BlockSpec((1, T * R, Ipk), lambda nb: (nb, 0, 0)),   # x tile
            pl.BlockSpec((Ipk, Hp), lambda nb: (0, 0)),             # wih0
            pl.BlockSpec((Lr, Hp, Hp), lambda nb: (0, 0, 0)),       # wih_rest
            pl.BlockSpec((L, Hp, Hp), lambda nb: (0, 0, 0)),        # whh
            pl.BlockSpec((L, 1, Hp), lambda nb: (0, 0, 0)),         # biases
            pl.BlockSpec((Hp, Opk), lambda nb: (0, 0)),             # wfc
            pl.BlockSpec((1, Opk), lambda nb: (0, 0)),              # bfc
        ],
        out_specs=pl.BlockSpec((1, R, Opk), lambda nb: (nb, 0, 0)),
        scratch_shapes=[pltpu.VMEM((T * R, Hp), jnp.float32),       # ping
                        pltpu.VMEM((T * R, Hp), jnp.float32)],      # pong
        compiler_params=pltpu.CompilerParams(**cparams),
    )(x_pk, pp["wih0"], pp["wih_rest"], pp["whh"], pp["b"], pp["wfc"], pp["bfc"])

    # Unpack: group g of tile nb, row r  ->  batch item nb*TB + g*R + r.
    out = out[..., : p * oslot].reshape(NB, R, p, oslot)[..., :O]
    out = out.transpose(0, 2, 1, 3).reshape(B, O)
    return out


# --------------------------- init & pure-JAX reference -----------------------

def init_params(key, input_size, hidden_size, num_layers, output_size):
    """Deterministic init mirroring nn.RNN / nn.Linear (uniform(-1/sqrt(H), 1/sqrt(H)))."""
    k = 1.0 / math.sqrt(hidden_size)
    keys = jax.random.split(key, 8)
    u = lambda kk, shape, bound: jax.random.uniform(kk, shape, jnp.float32, -bound, bound)

    # stored transposed for right-multiplication inside the kernel
    wih0 = u(keys[0], (input_size, hidden_size), k)                        # (I, H)
    wih_rest = u(keys[1], (max(num_layers - 1, 1), hidden_size, hidden_size), k)
    whh = u(keys[2], (num_layers, hidden_size, hidden_size), k)            # (L, H, H)
    b_ih = u(keys[3], (num_layers, 1, hidden_size), k)
    b_hh = u(keys[4], (num_layers, 1, hidden_size), k)
    wfc = u(keys[5], (hidden_size, output_size), k)                        # (H, O)
    bfc = u(keys[6], (1, output_size), k)
    return {"wih0": wih0, "wih_rest": wih_rest, "whh": whh,
            "b": b_ih + b_hh, "wfc": wfc, "bfc": bfc}


def rnn_reference(x, params):
    """Pure-JAX f32 reference of the PyTorch forward pass (HIGHEST precision)."""
    B, T, I = x.shape
    L, _, H = params["whh"].shape
    hi = jax.lax.Precision.HIGHEST
    layer_in = x
    for l in range(L):
        wih = params["wih0"] if l == 0 else params["wih_rest"][l - 1]
        whh = params["whh"][l]
        b = params["b"][l]
        h = jnp.zeros((B, H), jnp.float32)
        outs = []
        for t in range(T):
            h = jnp.tanh(jnp.dot(layer_in[:, t, :], wih, precision=hi)
                         + jnp.dot(h, whh, precision=hi) + b)
            outs.append(h)
        layer_in = jnp.stack(outs, axis=1)
    return jnp.dot(layer_in[:, -1, :], params["wfc"], precision=hi) + params["bfc"]


if __name__ == "__main__":
    # Small shapes consistent with InflationRNN(input_size, hidden_size, num_layers, output_size).
    batch, seq = 16, 8
    input_size, hidden_size, num_layers, output_size = 16, 32, 2, 4

    key = jax.random.PRNGKey(0)
    kx, kp = jax.random.split(key)
    x = jax.random.normal(kx, (batch, seq, input_size), dtype=jnp.float32)
    params = init_params(kp, input_size, hidden_size, num_layers, output_size)

    ref = rnn_reference(x, params)

    # Default single-tile path (v5e/v6e: one TensorCore, full batch per step).
    out1 = jax.block_until_ready(inflation_rnn_forward(x, params, num_batch_tiles=1))
    assert out1.shape == (batch, output_size)
    err1 = float(jnp.max(jnp.abs(out1 - ref)))
    assert jnp.allclose(out1, ref, atol=3e-2, rtol=3e-2), f"mismatch (NB=1): max|err|={err1}"

    # Two-tile path (v7x: one tile per TensorCore via the parallel grid axis).
    out2 = jax.block_until_ready(inflation_rnn_forward(x, params, num_batch_tiles=2))
    err2 = float(jnp.max(jnp.abs(out2 - ref)))
    assert jnp.allclose(out2, ref, atol=3e-2, rtol=3e-2), f"mismatch (NB=2): max|err|={err2}"

    print("KERNEL_OK")
</pallas_src>

<mosaic_0001>
module attributes {stable_mosaic.version = 11 : i64} {
  func.func @rnn_kernel(%arg0: i32, %arg1: memref<1x32x64xbf16, #tpu.memory_space<vmem>>, %arg2: memref<64x128xbf16, #tpu.memory_space<vmem>>, %arg3: memref<1x128x128xbf16, #tpu.memory_space<vmem>>, %arg4: memref<2x128x128xbf16, #tpu.memory_space<vmem>>, %arg5: memref<2x1x128xf32, #tpu.memory_space<vmem>>, %arg6: memref<128x128xbf16, #tpu.memory_space<vmem>>, %arg7: memref<1x128xf32, #tpu.memory_space<vmem>>, %arg8: memref<1x4x128xf32, #tpu.memory_space<vmem>>, %arg9: memref<32x128xf32, #tpu.memory_space<vmem>>, %arg10: memref<32x128xf32, #tpu.memory_space<vmem>>) attributes {dimension_semantics = [#tpu.dimension_semantics<parallel>], iteration_bounds = array<i64: 1>, scalar_prefetch = 0 : i64, scratch_operands = 2 : i64, tpu.core_type = #tpu.core_type<tc>, window_params = [{transform_indices = @transform_0, window_bounds = array<i64: 1, 32, 64>}, {pipeline_mode = #tpu.pipeline_mode<synchronous>, transform_indices = @transform_1, window_bounds = array<i64: 64, 128>}, {pipeline_mode = #tpu.pipeline_mode<synchronous>, transform_indices = @transform_2, window_bounds = array<i64: 1, 128, 128>}, {pipeline_mode = #tpu.pipeline_mode<synchronous>, transform_indices = @transform_3, window_bounds = array<i64: 2, 128, 128>}, {pipeline_mode = #tpu.pipeline_mode<synchronous>, transform_indices = @transform_4, window_bounds = array<i64: 2, 1, 128>}, {pipeline_mode = #tpu.pipeline_mode<synchronous>, transform_indices = @transform_5, window_bounds = array<i64: 128, 128>}, {pipeline_mode = #tpu.pipeline_mode<synchronous>, transform_indices = @transform_6, window_bounds = array<i64: 1, 128>}, {transform_indices = @transform_7, window_bounds = array<i64: 1, 4, 128>}]} {
    %c0 = arith.constant 0 : index
    %c0_0 = arith.constant 0 : index
    %c0_1 = arith.constant 0 : index
    %0 = vector.load %arg1[%c0, %c0_0, %c0_1] : memref<1x32x64xbf16, #tpu.memory_space<vmem>>, vector<1x32x64xbf16>
    %1 = vector.shape_cast %0 : vector<1x32x64xbf16> to vector<32x64xbf16>
    %c0_2 = arith.constant 0 : index
    %c0_3 = arith.constant 0 : index
    %2 = vector.load %arg2[%c0_2, %c0_3] : memref<64x128xbf16, #tpu.memory_space<vmem>>, vector<64x128xbf16>
    %cst = arith.constant dense<0.000000e+00> : vector<32x128xf32>
    %3 = tpu.matmul %1, %2, %cst {dimension_numbers = #tpu.dot_dimension_numbers<[1], [0], [0], [1], [0, 0, 1, 1], [], []>} : vector<32x64xbf16>, vector<64x128xbf16>, vector<32x128xf32> -> vector<32x128xf32>
    %c0_4 = arith.constant 0 : index
    %c0_5 = arith.constant 0 : index
    %c0_6 = arith.constant 0 : index
    %4 = vector.load %arg5[%c0_4, %c0_5, %c0_6] : memref<2x1x128xf32, #tpu.memory_space<vmem>>, vector<1x1x128xf32>
    %5 = vector.shape_cast %4 : vector<1x1x128xf32> to vector<1x128xf32>
    %6 = vector.broadcast %5 : vector<1x128xf32> to vector<32x128xf32>
    %7 = arith.addf %3, %6 : vector<32x128xf32>
    %c0_7 = arith.constant 0 : index
    %c0_8 = arith.constant 0 : index
    %8 = vector.load %arg9[%c0_7, %c0_8] : memref<32x128xf32, #tpu.memory_space<vmem>>, vector<32x128xf32>
    tpu.vector_store %arg9[%c0_7, %c0_8], %7 {strides = array<i32>} : memref<32x128xf32, #tpu.memory_space<vmem>>, vector<32x128xf32>,
    %c0_9 = arith.constant 0 : index
    %c0_10 = arith.constant 0 : index
    %c0_11 = arith.constant 0 : index
    %9 = vector.load %arg4[%c0_9, %c0_10, %c0_11] : memref<2x128x128xbf16, #tpu.memory_space<vmem>>, vector<1x128x128xbf16>
    %10 = vector.shape_cast %9 : vector<1x128x128xbf16> to vector<128x128xbf16>
    %cst_12 = arith.constant 0.000000e+00 : f32
    %11 = vector.broadcast %cst_12 : f32 to vector<4x128xf32>
    %c0_13 = arith.constant 0 : index
    %c0_14 = arith.constant 0 : index
    %12 = vector.load %arg9[%c0_13, %c0_14] : memref<32x128xf32, #tpu.memory_space<vmem>>, vector<4x128xf32>
    %13 = arith.truncf %11 : vector<4x128xf32> to vector<4x128xbf16>
    %cst_15 = arith.constant dense<0.000000e+00> : vector<4x128xf32>
    %14 = tpu.matmul %13, %10, %cst_15 {dimension_numbers = #tpu.dot_dimension_numbers<[1], [0], [0], [1], [0, 0, 1, 1], [], []>} : vector<4x128xbf16>, vector<128x128xbf16>, vector<4x128xf32> -> vector<4x128xf32>
    %15 = arith.addf %12, %14 : vector<4x128xf32>
    %16 = math.tanh %15 : vector<4x128xf32>
    %c0_16 = arith.constant 0 : index
    %c0_17 = arith.constant 0 : index
    %17 = vector.load %arg9[%c0_16, %c0_17] : memref<32x128xf32, #tpu.memory_space<vmem>>, vector<4x128xf32>
    tpu.vector_store %arg9[%c0_16, %c0_17], %16 {strides = array<i32>} : memref<32x128xf32, #tpu.memory_space<vmem>>, vector<4x128xf32>,
    %c4 = arith.constant 4 : index
    %c0_18 = arith.constant 0 : index
    %18 = vector.load %arg9[%c4, %c0_18] : memref<32x128xf32, #tpu.memory_space<vmem>>, vector<4x128xf32>
    %19 = arith.truncf %16 : vector<4x128xf32> to vector<4x128xbf16>
    %cst_19 = arith.constant dense<0.000000e+00> : vector<4x128xf32>
    %20 = tpu.matmul %19, %10, %cst_19 {dimension_numbers = #tpu.dot_dimension_numbers<[1], [0], [0], [1], [0, 0, 1, 1], [], []>} : vector<4x128xbf16>, vector<128x128xbf16>, vector<4x128xf32> -> vector<4x128xf32>
    %21 = arith.addf %18, %20 : vector<4x128xf32>
    %22 = math.tanh %21 : vector<4x128xf32>
    %c4_20 = arith.constant 4 : index
    %c0_21 = arith.constant 0 : index
    %23 = vector.load %arg9[%c4_20, %c0_21] : memref<32x128xf32, #tpu.memory_space<vmem>>, vector<4x128xf32>
    tpu.vector_store %arg9[%c4_20, %c0_21], %22 {strides = array<i32>} : memref<32x128xf32, #tpu.memory_space<vmem>>, vector<4x128xf32>,
    %c8 = arith.constant 8 : index
    %c0_22 = arith.constant 0 : index
    %24 = vector.load %arg9[%c8, %c0_22] : memref<32x128xf32, #tpu.memory_space<vmem>>, vector<4x128xf32>
    %25 = arith.truncf %22 : vector<4x128xf32> to vector<4x128xbf16>
    %cst_23 = arith.constant dense<0.000000e+00> : vector<4x128xf32>
    %26 = tpu.matmul %25, %10, %cst_23 {dimension_numbers = #tpu.dot_dimension_numbers<[1], [0], [0], [1], [0, 0, 1, 1], [], []>} : vector<4x128xbf16>, vector<128x128xbf16>, vector<4x128xf32> -> vector<4x128xf32>
    %27 = arith.addf %24, %26 : vector<4x128xf32>
    %28 = math.tanh %27 : vector<4x128xf32>
    %c8_24 = arith.constant 8 : index
    %c0_25 = arith.constant 0 : index
    %29 = vector.load %arg9[%c8_24, %c0_25] : memref<32x128xf32, #tpu.memory_space<vmem>>, vector<4x128xf32>
    tpu.vector_store %arg9[%c8_24, %c0_25], %28 {strides = array<i32>} : memref<32x128xf32, #tpu.memory_space<vmem>>, vector<4x128xf32>,
    %c12 = arith.constant 12 : index
    %c0_26 = arith.constant 0 : index
    %30 = vector.load %arg9[%c12, %c0_26] : memref<32x128xf32, #tpu.memory_space<vmem>>, vector<4x128xf32>
    %31 = arith.truncf %28 : vector<4x128xf32> to vector<4x128xbf16>
    %cst_27 = arith.constant dense<0.000000e+00> : vector<4x128xf32>
    %32 = tpu.matmul %31, %10, %cst_27 {dimension_numbers = #tpu.dot_dimension_numbers<[1], [0], [0], [1], [0, 0, 1, 1], [], []>} : vector<4x128xbf16>, vector<128x128xbf16>, vector<4x128xf32> -> vector<4x128xf32>
    %33 = arith.addf %30, %32 : vector<4x128xf32>
    %34 = math.tanh %33 : vector<4x128xf32>
    %c12_28 = arith.constant 12 : index
    %c0_29 = arith.constant 0 : index
    %35 = vector.load %arg9[%c12_28, %c0_29] : memref<32x128xf32, #tpu.memory_space<vmem>>, vector<4x128xf32>
    tpu.vector_store %arg9[%c12_28, %c0_29], %34 {strides = array<i32>} : memref<32x128xf32, #tpu.memory_space<vmem>>, vector<4x128xf32>,
    %c16 = arith.constant 16 : index
    %c0_30 = arith.constant 0 : index
    %36 = vector.load %arg9[%c16, %c0_30] : memref<32x128xf32, #tpu.memory_space<vmem>>, vector<4x128xf32>
    %37 = arith.truncf %34 : vector<4x128xf32> to vector<4x128xbf16>
    %cst_31 = arith.constant dense<0.000000e+00> : vector<4x128xf32>
    %38 = tpu.matmul %37, %10, %cst_31 {dimension_numbers = #tpu.dot_dimension_numbers<[1], [0], [0], [1], [0, 0, 1, 1], [], []>} : vector<4x128xbf16>, vector<128x128xbf16>, vector<4x128xf32> -> vector<4x128xf32>
    %39 = arith.addf %36, %38 : vector<4x128xf32>
    %40 = math.tanh %39 : vector<4x128xf32>
    %c16_32 = arith.constant 16 : index
    %c0_33 = arith.constant 0 : index
    %41 = vector.load %arg9[%c16_32, %c0_33] : memref<32x128xf32, #tpu.memory_space<vmem>>, vector<4x128xf32>
    tpu.vector_store %arg9[%c16_32, %c0_33], %40 {strides = array<i32>} : memref<32x128xf32, #tpu.memory_space<vmem>>, vector<4x128xf32>,
    %c20 = arith.constant 20 : index
    %c0_34 = arith.constant 0 : index
    %42 = vector.load %arg9[%c20, %c0_34] : memref<32x128xf32, #tpu.memory_space<vmem>>, vector<4x128xf32>
    %43 = arith.truncf %40 : vector<4x128xf32> to vector<4x128xbf16>
    %cst_35 = arith.constant dense<0.000000e+00> : vector<4x128xf32>
    %44 = tpu.matmul %43, %10, %cst_35 {dimension_numbers = #tpu.dot_dimension_numbers<[1], [0], [0], [1], [0, 0, 1, 1], [], []>} : vector<4x128xbf16>, vector<128x128xbf16>, vector<4x128xf32> -> vector<4x128xf32>
    %45 = arith.addf %42, %44 : vector<4x128xf32>
    %46 = math.tanh %45 : vector<4x128xf32>
    %c20_36 = arith.constant 20 : index
    %c0_37 = arith.constant 0 : index
    %47 = vector.load %arg9[%c20_36, %c0_37] : memref<32x128xf32, #tpu.memory_space<vmem>>, vector<4x128xf32>
    tpu.vector_store %arg9[%c20_36, %c0_37], %46 {strides = array<i32>} : memref<32x128xf32, #tpu.memory_space<vmem>>, vector<4x128xf32>,
    %c24 = arith.constant 24 : index
    %c0_38 = arith.constant 0 : index
    %48 = vector.load %arg9[%c24, %c0_38] : memref<32x128xf32, #tpu.memory_space<vmem>>, vector<4x128xf32>
    %49 = arith.truncf %46 : vector<4x128xf32> to vector<4x128xbf16>
    %cst_39 = arith.constant dense<0.000000e+00> : vector<4x128xf32>
    %50 = tpu.matmul %49, %10, %cst_39 {dimension_numbers = #tpu.dot_dimension_numbers<[1], [0], [0], [1], [0, 0, 1, 1], [], []>} : vector<4x128xbf16>, vector<128x128xbf16>, vector<4x128xf32> -> vector<4x128xf32>
    %51 = arith.addf %48, %50 : vector<4x128xf32>
    %52 = math.tanh %51 : vector<4x128xf32>
    %c24_40 = arith.constant 24 : index
    %c0_41 = arith.constant 0 : index
    %53 = vector.load %arg9[%c24_40, %c0_41] : memref<32x128xf32, #tpu.memory_space<vmem>>, vector<4x128xf32>
    tpu.vector_store %arg9[%c24_40, %c0_41], %52 {strides = array<i32>} : memref<32x128xf32, #tpu.memory_space<vmem>>, vector<4x128xf32>,
    %c28 = arith.constant 28 : index
    %c0_42 = arith.constant 0 : index
    %54 = vector.load %arg9[%c28, %c0_42] : memref<32x128xf32, #tpu.memory_space<vmem>>, vector<4x128xf32>
    %55 = arith.truncf %52 : vector<4x128xf32> to vector<4x128xbf16>
    %cst_43 = arith.constant dense<0.000000e+00> : vector<4x128xf32>
    %56 = tpu.matmul %55, %10, %cst_43 {dimension_numbers = #tpu.dot_dimension_numbers<[1], [0], [0], [1], [0, 0, 1, 1], [], []>} : vector<4x128xbf16>, vector<128x128xbf16>, vector<4x128xf32> -> vector<4x128xf32>
    %57 = arith.addf %54, %56 : vector<4x128xf32>
    %58 = math.tanh %57 : vector<4x128xf32>
    %c28_44 = arith.constant 28 : index
    %c0_45 = arith.constant 0 : index
    %59 = vector.load %arg9[%c28_44, %c0_45] : memref<32x128xf32, #tpu.memory_space<vmem>>, vector<4x128xf32>
    tpu.vector_store %arg9[%c28_44, %c0_45], %58 {strides = array<i32>} : memref<32x128xf32, #tpu.memory_space<vmem>>, vector<4x128xf32>,
    %c0_46 = arith.constant 0 : index
    %c0_47 = arith.constant 0 : index
    %60 = vector.load %arg9[%c0_46, %c0_47] : memref<32x128xf32, #tpu.memory_space<vmem>>, vector<32x128xf32>
    %61 = arith.truncf %60 : vector<32x128xf32> to vector<32x128xbf16>
    %c0_48 = arith.constant 0 : index
    %c0_49 = arith.constant 0 : index
    %c0_50 = arith.constant 0 : index
    %62 = vector.load %arg3[%c0_48, %c0_49, %c0_50] : memref<1x128x128xbf16, #tpu.memory_space<vmem>>, vector<1x128x128xbf16>
    %63 = vector.shape_cast %62 : vector<1x128x128xbf16> to vector<128x128xbf16>
    %cst_51 = arith.constant dense<0.000000e+00> : vector<32x128xf32>
    %64 = tpu.matmul %61, %63, %cst_51 {dimension_numbers = #tpu.dot_dimension_numbers<[1], [0], [0], [1], [0, 0, 1, 1], [], []>} : vector<32x128xbf16>, vector<128x128xbf16>, vector<32x128xf32> -> vector<32x128xf32>
    %c1 = arith.constant 1 : index
    %c0_52 = arith.constant 0 : index
    %c0_53 = arith.constant 0 : index
    %65 = vector.load %arg5[%c1, %c0_52, %c0_53] : memref<2x1x128xf32, #tpu.memory_space<vmem>>, vector<1x1x128xf32>
    %66 = vector.shape_cast %65 : vector<1x1x128xf32> to vector<1x128xf32>
    %67 = vector.broadcast %66 : vector<1x128xf32> to vector<32x128xf32>
    %68 = arith.addf %64, %67 : vector<32x128xf32>
    %c0_54 = arith.constant 0 : index
    %c0_55 = arith.constant 0 : index
    %69 = vector.load %arg10[%c0_54, %c0_55] : memref<32x128xf32, #tpu.memory_space<vmem>>, vector<32x128xf32>
    tpu.vector_store %arg10[%c0_54, %c0_55], %68 {strides = array<i32>} : memref<32x128xf32, #tpu.memory_space<vmem>>, vector<32x128xf32>,
    %c1_56 = arith.constant 1 : index
    %c0_57 = arith.constant 0 : index
    %c0_58 = arith.constant 0 : index
    %70 = vector.load %arg4[%c1_56, %c0_57, %c0_58] : memref<2x128x128xbf16, #tpu.memory_space<vmem>>, vector<1x128x128xbf16>
    %71 = vector.shape_cast %70 : vector<1x128x128xbf16> to vector<128x128xbf16>
    %cst_59 = arith.constant 0.000000e+00 : f32
    %72 = vector.broadcast %cst_59 : f32 to vector<4x128xf32>
    %c0_60 = arith.constant 0 : index
    %c0_61 = arith.constant 0 : index
    %73 = vector.load %arg10[%c0_60, %c0_61] : memref<32x128xf32, #tpu.memory_space<vmem>>, vector<4x128xf32>
    %74 = arith.truncf %72 : vector<4x128xf32> to vector<4x128xbf16>
    %cst_62 = arith.constant dense<0.000000e+00> : vector<4x128xf32>
    %75 = tpu.matmul %74, %71, %cst_62 {dimension_numbers = #tpu.dot_dimension_numbers<[1], [0], [0], [1], [0, 0, 1, 1], [], []>} : vector<4x128xbf16>, vector<128x128xbf16>, vector<4x128xf32> -> vector<4x128xf32>
    %76 = arith.addf %73, %75 : vector<4x128xf32>
    %77 = math.tanh %76 : vector<4x128xf32>
    %c4_63 = arith.constant 4 : index
    %c0_64 = arith.constant 0 : index
    %78 = vector.load %arg10[%c4_63, %c0_64] : memref<32x128xf32, #tpu.memory_space<vmem>>, vector<4x128xf32>
    %79 = arith.truncf %77 : vector<4x128xf32> to vector<4x128xbf16>
    %cst_65 = arith.constant dense<0.000000e+00> : vector<4x128xf32>
    %80 = tpu.matmul %79, %71, %cst_65 {dimension_numbers = #tpu.dot_dimension_numbers<[1], [0], [0], [1], [0, 0, 1, 1], [], []>} : vector<4x128xbf16>, vector<128x128xbf16>, vector<4x128xf32> -> vector<4x128xf32>
    %81 = arith.addf %78, %80 : vector<4x128xf32>
    %82 = math.tanh %81 : vector<4x128xf32>
    %c8_66 = arith.constant 8 : index
    %c0_67 = arith.constant 0 : index
    %83 = vector.load %arg10[%c8_66, %c0_67] : memref<32x128xf32, #tpu.memory_space<vmem>>, vector<4x128xf32>
    %84 = arith.truncf %82 : vector<4x128xf32> to vector<4x128xbf16>
    %cst_68 = arith.constant dense<0.000000e+00> : vector<4x128xf32>
    %85 = tpu.matmul %84, %71, %cst_68 {dimension_numbers = #tpu.dot_dimension_numbers<[1], [0], [0], [1], [0, 0, 1, 1], [], []>} : vector<4x128xbf16>, vector<128x128xbf16>, vector<4x128xf32> -> vector<4x128xf32>
    %86 = arith.addf %83, %85 : vector<4x128xf32>
    %87 = math.tanh %86 : vector<4x128xf32>
    %c12_69 = arith.constant 12 : index
    %c0_70 = arith.constant 0 : index
    %88 = vector.load %arg10[%c12_69, %c0_70] : memref<32x128xf32, #tpu.memory_space<vmem>>, vector<4x128xf32>
    %89 = arith.truncf %87 : vector<4x128xf32> to vector<4x128xbf16>
    %cst_71 = arith.constant dense<0.000000e+00> : vector<4x128xf32>
    %90 = tpu.matmul %89, %71, %cst_71 {dimension_numbers = #tpu.dot_dimension_numbers<[1], [0], [0], [1], [0, 0, 1, 1], [], []>} : vector<4x128xbf16>, vector<128x128xbf16>, vector<4x128xf32> -> vector<4x128xf32>
    %91 = arith.addf %88, %90 : vector<4x128xf32>
    %92 = math.tanh %91 : vector<4x128xf32>
    %c16_72 = arith.constant 16 : index
    %c0_73 = arith.constant 0 : index
    %93 = vector.load %arg10[%c16_72, %c0_73] : memref<32x128xf32, #tpu.memory_space<vmem>>, vector<4x128xf32>
    %94 = arith.truncf %92 : vector<4x128xf32> to vector<4x128xbf16>
    %cst_74 = arith.constant dense<0.000000e+00> : vector<4x128xf32>
    %95 = tpu.matmul %94, %71, %cst_74 {dimension_numbers = #tpu.dot_dimension_numbers<[1], [0], [0], [1], [0, 0, 1, 1], [], []>} : vector<4x128xbf16>, vector<128x128xbf16>, vector<4x128xf32> -> vector<4x128xf32>
    %96 = arith.addf %93, %95 : vector<4x128xf32>
    %97 = math.tanh %96 : vector<4x128xf32>
    %c20_75 = arith.constant 20 : index
    %c0_76 = arith.constant 0 : index
    %98 = vector.load %arg10[%c20_75, %c0_76] : memref<32x128xf32, #tpu.memory_space<vmem>>, vector<4x128xf32>
    %99 = arith.truncf %97 : vector<4x128xf32> to vector<4x128xbf16>
    %cst_77 = arith.constant dense<0.000000e+00> : vector<4x128xf32>
    %100 = tpu.matmul %99, %71, %cst_77 {dimension_numbers = #tpu.dot_dimension_numbers<[1], [0], [0], [1], [0, 0, 1, 1], [], []>} : vector<4x128xbf16>, vector<128x128xbf16>, vector<4x128xf32> -> vector<4x128xf32>
    %101 = arith.addf %98, %100 : vector<4x128xf32>
    %102 = math.tanh %101 : vector<4x128xf32>
    %c24_78 = arith.constant 24 : index
    %c0_79 = arith.constant 0 : index
    %103 = vector.load %arg10[%c24_78, %c0_79] : memref<32x128xf32, #tpu.memory_space<vmem>>, vector<4x128xf32>
    %104 = arith.truncf %102 : vector<4x128xf32> to vector<4x128xbf16>
    %cst_80 = arith.constant dense<0.000000e+00> : vector<4x128xf32>
    %105 = tpu.matmul %104, %71, %cst_80 {dimension_numbers = #tpu.dot_dimension_numbers<[1], [0], [0], [1], [0, 0, 1, 1], [], []>} : vector<4x128xbf16>, vector<128x128xbf16>, vector<4x128xf32> -> vector<4x128xf32>
    %106 = arith.addf %103, %105 : vector<4x128xf32>
    %107 = math.tanh %106 : vector<4x128xf32>
    %c28_81 = arith.constant 28 : index
    %c0_82 = arith.constant 0 : index
    %108 = vector.load %arg10[%c28_81, %c0_82] : memref<32x128xf32, #tpu.memory_space<vmem>>, vector<4x128xf32>
    %109 = arith.truncf %107 : vector<4x128xf32> to vector<4x128xbf16>
    %cst_83 = arith.constant dense<0.000000e+00> : vector<4x128xf32>
    %110 = tpu.matmul %109, %71, %cst_83 {dimension_numbers = #tpu.dot_dimension_numbers<[1], [0], [0], [1], [0, 0, 1, 1], [], []>} : vector<4x128xbf16>, vector<128x128xbf16>, vector<4x128xf32> -> vector<4x128xf32>
    %111 = arith.addf %108, %110 : vector<4x128xf32>
    %112 = math.tanh %111 : vector<4x128xf32>
    %113 = arith.truncf %112 : vector<4x128xf32> to vector<4x128xbf16>
    %c0_84 = arith.constant 0 : index
    %c0_85 = arith.constant 0 : index
    %114 = vector.load %arg6[%c0_84, %c0_85] : memref<128x128xbf16, #tpu.memory_space<vmem>>, vector<128x128xbf16>
    %cst_86 = arith.constant dense<0.000000e+00> : vector<4x128xf32>
    %115 = tpu.matmul %113, %114, %cst_86 {dimension_numbers = #tpu.dot_dimension_numbers<[1], [0], [0], [1], [0, 0, 1, 1], [], []>} : vector<4x128xbf16>, vector<128x128xbf16>, vector<4x128xf32> -> vector<4x128xf32>
    %c0_87 = arith.constant 0 : index
    %c0_88 = arith.constant 0 : index
    %116 = vector.load %arg7[%c0_87, %c0_88] : memref<1x128xf32, #tpu.memory_space<vmem>>, vector<1x128xf32>
    %117 = vector.broadcast %116 : vector<1x128xf32> to vector<4x128xf32>
    %118 = arith.addf %115, %117 : vector<4x128xf32>
    %c0_89 = arith.constant 0 : index
    %c0_90 = arith.constant 0 : index
    %c0_91 = arith.constant 0 : index
    %119 = vector.load %arg8[%c0_89, %c0_90, %c0_91] : memref<1x4x128xf32, #tpu.memory_space<vmem>>, vector<1x4x128xf32>
    %120 = vector.shape_cast %119 : vector<1x4x128xf32> to vector<4x128xf32>
    %121 = vector.shape_cast %118 : vector<4x128xf32> to vector<1x4x128xf32>
    tpu.vector_store %arg8[%c0_89, %c0_90, %c0_91], %121 {strides = array<i32>} : memref<1x4x128xf32, #tpu.memory_space<vmem>>, vector<1x4x128xf32>,
    return
  }
  func.func @transform_0(%arg0: i32) -> (i32, i32, i32) {
    %c0_i32 = arith.constant 0 : i32
    %c0_i32_0 = arith.constant 0 : i32
    %c0_i32_1 = arith.constant 0 : i32
    return %arg0, %c0_i32, %c0_i32_0 : i32, i32, i32
  }
  func.func @transform_1(%arg0: i32) -> (i32, i32) {
    %c0_i32 = arith.constant 0 : i32
    %c0_i32_0 = arith.constant 0 : i32
    %c0_i32_1 = arith.constant 0 : i32
    return %c0_i32, %c0_i32_0 : i32, i32
  }
  func.func @transform_2(%arg0: i32) -> (i32, i32, i32) {
    %c0_i32 = arith.constant 0 : i32
    %c0_i32_0 = arith.constant 0 : i32
    %c0_i32_1 = arith.constant 0 : i32
    %c0_i32_2 = arith.constant 0 : i32
    return %c0_i32, %c0_i32_0, %c0_i32_1 : i32, i32, i32
  }
  func.func @transform_3(%arg0: i32) -> (i32, i32, i32) {
    %c0_i32 = arith.constant 0 : i32
    %c0_i32_0 = arith.constant 0 : i32
    %c0_i32_1 = arith.constant 0 : i32
    %c0_i32_2 = arith.constant 0 : i32
    return %c0_i32, %c0_i32_0, %c0_i32_1 : i32, i32, i32
  }
  func.func @transform_4(%arg0: i32) -> (i32, i32, i32) {
    %c0_i32 = arith.constant 0 : i32
    %c0_i32_0 = arith.constant 0 : i32
    %c0_i32_1 = arith.constant 0 : i32
    %c0_i32_2 = arith.constant 0 : i32
    return %c0_i32, %c0_i32_0, %c0_i32_1 : i32, i32, i32
  }
  func.func @transform_5(%arg0: i32) -> (i32, i32) {
    %c0_i32 = arith.constant 0 : i32
    %c0_i32_0 = arith.constant 0 : i32
    %c0_i32_1 = arith.constant 0 : i32
    return %c0_i32, %c0_i32_0 : i32, i32
  }
  func.func @transform_6(%arg0: i32) -> (i32, i32) {
    %c0_i32 = arith.constant 0 : i32
    %c0_i32_0 = arith.constant 0 : i32
    %c0_i32_1 = arith.constant 0 : i32
    return %c0_i32, %c0_i32_0 : i32, i32
  }
  func.func @transform_7(%arg0: i32) -> (i32, i32, i32) {
    %c0_i32 = arith.constant 0 : i32
    %c0_i32_0 = arith.constant 0 : i32
    %c0_i32_1 = arith.constant 0 : i32
    return %arg0, %c0_i32, %c0_i32_0 : i32, i32, i32
  }
}

</mosaic_0001>

<llo_original>
// kernel: tpu_custom_call.1
$region0: #{tpu_custom_call.1}
  #allocation0 [shape = 'u32[]', space=smem, size = 0x4, offset = 0x4, fixed_abs, tag = 'smem constant byte address 0x4 - core index']
  #allocation1 [shape = 'u32[144,128]{1,0:T(1,128)}', space=vmem, size = 0x12000, scoped, tag = 'internal scratch']
  #allocation2 [shape = 'f32[32,128]{1,0:T(8,128)}', space=vmem, size = 0x4000, scoped, tag = 'scratch operand']
  #allocation3 [shape = 'f32[32,128]{1,0:T(8,128)}', space=vmem, size = 0x4000, scoped, tag = 'scratch operand']
  %s0 = inlined_call_operand.hbm [shape: bf16[1,32,64], index: 0, kind: input, shape index: {}]
  %s1 = inlined_call_operand.hbm [shape: bf16[64,128], index: 1, kind: input, shape index: {}]
  %s2 = inlined_call_operand.hbm [shape: bf16[1,128,128], index: 2, kind: input, shape index: {}]
  %s3 = inlined_call_operand.hbm [shape: bf16[2,128,128], index: 3, kind: input, shape index: {}]
  %s4 = inlined_call_operand.vmem [shape: f32[2,1,128], index: 4, kind: input, shape index: {}]
  %s5 = inlined_call_operand.hbm [shape: bf16[128,128], index: 5, kind: input, shape index: {}]
  %s6 = inlined_call_operand.vmem [shape: f32[1,128], index: 6, kind: input, shape index: {}]
  %s7 = inlined_call_operand.hbm [shape: f32[1,4,128], index: 7, kind: output, shape index: {}]
  %s8 = sld [smem:[#allocation0]]
  $region58: #{tpu_custom_call.1} parent=0
    _
  %s10 = ssub.s32 1, %s8
  %s11 = scalar_select 0, %s10, %s8
  $region1: #{tpu_custom_call.1} parent=0
    #allocation4 [shape = 'u8[8192]{0}', space=vmem, size = 0x2000, scoped, tag = 'input window, operand 0, single buffered']
    #allocation5 [shape = 's32[1]{0}', space=sflag, size = 0x4, scoped, tag = 'scoped memory for tpu_custom_call.1']
    #allocation6 [shape = 's32[1]{0}', space=sflag, size = 0x4, scoped, tag = 'scoped memory for tpu_custom_call.1']
    #allocation7 [shape = 'u8[16384]{0}', space=vmem, size = 0x4000, scoped, tag = 'input window, operand 1, single buffered']
    #allocation8 [shape = 's32[1]{0}', space=sflag, size = 0x4, scoped, tag = 'scoped memory for tpu_custom_call.1']
    #allocation9 [shape = 'u8[32768]{0}', space=vmem, size = 0x8000, scoped, tag = 'input window, operand 2, single buffered']
    #allocation10 [shape = 'u8[65536]{0}', space=vmem, size = 0x10000, scoped, tag = 'input window, operand 3, single buffered']
    #allocation11 [shape = 's32[1]{0}', space=sflag, size = 0x4, scoped, tag = 'scoped memory for tpu_custom_call.1']
    #allocation12 [shape = 'u8[32768]{0}', space=vmem, size = 0x8000, scoped, tag = 'input window, operand 5, single buffered']
    #allocation13 [shape = 'u8[2048]{0}', space=vmem, size = 0x800, scoped, tag = 'output window, operand 0, single buffered']
    %12 = vsyncpa [#allocation5], 0
    %13 = vsyncpa [#allocation8], 0
    %14 = vsyncpa [#allocation11], 0
    %15 = vsyncpa [#allocation6], 0
    // Predicated region
    $region2: #{tpu_custom_call.1} parent=1 // pred_check
      _
    $region3: #{tpu_custom_call.1} parent=1 // pred_check_branch
      %17 = sbr.rel (0) target = $region5
    $region4: #{tpu_custom_call.1} parent=1 // pred_region
      %s19 = ssub.s32 256, 256
      %20 = vsyncadd [#allocation5], %s19
      %s21 = sshll.u32 [#allocation4], 4
      %s22 = int_to_ptr.vmem [resolvable:$true] %s21
      %27 = dma.hbm_to_vmem [thread:$0]  %s0, 256, %s22, [#allocation5], 64, 64, 4
    $region5: #{tpu_custom_call.1} parent=1 // pred_fallthru
      _
    // Predicated region
    $region6: #{tpu_custom_call.1} parent=1 // pred_check
      _
    $region7: #{tpu_custom_call.1} parent=1 // pred_check_branch
      %29 = sbr.rel (0) target = $region9
    $region8: #{tpu_custom_call.1} parent=1 // pred_region
      %s31 = ssub.s32 512, 512
      %32 = vsyncadd [#allocation8], %s31
      %s33 = sshll.u32 [#allocation7], 4
      %s34 = int_to_ptr.vmem [resolvable:$true] %s33
      %39 = dma.hbm_to_vmem [thread:$0]  %s1, 512, %s34, [#allocation8], 64, 64, 4
    $region9: #{tpu_custom_call.1} parent=1 // pred_fallthru
      _
    // Predicated region
    $region10: #{tpu_custom_call.1} parent=1 // pred_check
      _
    $region11: #{tpu_custom_call.1} parent=1 // pred_check_branch
      %41 = sbr.rel (0) target = $region13
    $region12: #{tpu_custom_call.1} parent=1 // pred_region
      %s43 = ssub.s32 1024, 1024
      %44 = vsyncadd [#allocation8], %s43
      %s45 = sshll.u32 [#allocation9], 4
      %s46 = int_to_ptr.vmem [resolvable:$true] %s45
      %51 = dma.hbm_to_vmem [thread:$0]  %s2, 1024, %s46, [#allocation8], 64, 64, 4
    $region13: #{tpu_custom_call.1} parent=1 // pred_fallthru
      _
    // Predicated region
    $region14: #{tpu_custom_call.1} parent=1 // pred_check
      _
    $region15: #{tpu_custom_call.1} parent=1 // pred_check_branch
      %53 = sbr.rel (0) target = $region17
    $region16: #{tpu_custom_call.1} parent=1 // pred_region
      %s55 = ssub.s32 2048, 2048
      %56 = vsyncadd [#allocation11], %s55
      %s57 = sshll.u32 [#allocation10], 4
      %s58 = int_to_ptr.vmem [resolvable:$true] %s57
      %63 = dma.hbm_to_vmem [thread:$0]  %s3, 2048, %s58, [#allocation11], 64, 64, 4
    $region17: #{tpu_custom_call.1} parent=1 // pred_fallthru
      _
    // Predicated region
    $region18: #{tpu_custom_call.1} parent=1 // pred_check
      _
    $region19: #{tpu_custom_call.1} parent=1 // pred_check_branch
      %65 = sbr.rel (0) target = $region21
    $region20: #{tpu_custom_call.1} parent=1 // pred_region
      _
    $region21: #{tpu_custom_call.1} parent=1 // pred_fallthru
      _
    // Predicated region
    $region22: #{tpu_custom_call.1} parent=1 // pred_check
      _
    $region23: #{tpu_custom_call.1} parent=1 // pred_check_branch
      %67 = sbr.rel (0) target = $region25
    $region24: #{tpu_custom_call.1} parent=1 // pred_region
      %s69 = ssub.s32 1024, 1024
      %70 = vsyncadd [#allocation11], %s69
      %s71 = sshll.u32 [#allocation12], 4
      %s72 = int_to_ptr.vmem [resolvable:$true] %s71
      %77 = dma.hbm_to_vmem [thread:$0]  %s5, 1024, %s72, [#allocation11], 64, 64, 4
    $region25: #{tpu_custom_call.1} parent=1 // pred_fallthru
      _
    // Predicated region
    $region26: #{tpu_custom_call.1} parent=1 // pred_check
      _
    $region27: #{tpu_custom_call.1} parent=1 // pred_check_branch
      %79 = sbr.rel (0) target = $region29
    $region28: #{tpu_custom_call.1} parent=1 // pred_region
      _
    $region29: #{tpu_custom_call.1} parent=1 // pred_fallthru
      _
    // Predicated region
    $region30: #{tpu_custom_call.1} parent=1 // pred_check
      _
    $region31: #{tpu_custom_call.1} parent=1 // pred_check_branch
      %81 = sbr.rel (0) target = $region33
    $region32: #{tpu_custom_call.1} parent=1 // pred_region
      %82 = dma.done [#allocation5], 256
    $region33: #{tpu_custom_call.1} parent=1 // pred_fallthru
      _
    // Predicated region
    $region34: #{tpu_custom_call.1} parent=1 // pred_check
      _
    $region35: #{tpu_custom_call.1} parent=1 // pred_check_branch
      %84 = sbr.rel (0) target = $region37
    $region36: #{tpu_custom_call.1} parent=1 // pred_region
      %85 = dma.done [#allocation8], 512
    $region37: #{tpu_custom_call.1} parent=1 // pred_fallthru
      _
    // Predicated region
    $region38: #{tpu_custom_call.1} parent=1 // pred_check
      _
    $region39: #{tpu_custom_call.1} parent=1 // pred_check_branch
      %87 = sbr.rel (0) target = $region41
    $region40: #{tpu_custom_call.1} parent=1 // pred_region
      %88 = dma.done [#allocation8], 1024
    $region41: #{tpu_custom_call.1} parent=1 // pred_fallthru
      _
    // Predicated region
    $region42: #{tpu_custom_call.1} parent=1 // pred_check
      _
    $region43: #{tpu_custom_call.1} parent=1 // pred_check_branch
      %90 = sbr.rel (0) target = $region45
    $region44: #{tpu_custom_call.1} parent=1 // pred_region
      %91 = dma.done [#allocation11], 2048
    $region45: #{tpu_custom_call.1} parent=1 // pred_fallthru
      _
    // Predicated region
    $region46: #{tpu_custom_call.1} parent=1 // pred_check
      _
    $region47: #{tpu_custom_call.1} parent=1 // pred_check_branch
      %93 = sbr.rel (0) target = $region49
    $region48: #{tpu_custom_call.1} parent=1 // pred_region
      %94 = dma.done [#allocation11], 1024
    $region49: #{tpu_custom_call.1} parent=1 // pred_fallthru
      _
    %v96 = vld [vmem:[#allocation4] sm:$0xf]
    %v97 = vld [vmem:[#allocation4 + $0x4] sm:$0xf]
    %v98 = vld [vmem:[#allocation4 + $0x8] sm:$0xf]
    %v99 = vld [vmem:[#allocation4 + $0xc] sm:$0xf]
    %v100 = vld [vmem:[#allocation7] sm:$0xf]
    %v101 = vld [vmem:[#allocation7 + $0x4] sm:$0xf]
    %v102 = vld [vmem:[#allocation7 + $0x8] sm:$0xf]
    %v103 = vld [vmem:[#allocation7 + $0xc] sm:$0xf]
    %v104 = vld [vmem:[#allocation7 + $0x10] sm:$0xf]
    %v105 = vld [vmem:[#allocation7 + $0x14] sm:$0xf]
    %v106 = vld [vmem:[#allocation7 + $0x18] sm:$0xf]
    %v107 = vld [vmem:[#allocation7 + $0x1c] sm:$0xf]
    %v108 = vld [vmem:[%s4] sm:$0x1]
    %v110 = vlaneseq
    %v111 = vshrl.u32 %v110, 7
    %v112 = vsub.s32 0, %v111
    %v113 = vrot.slane %v108, %v112
    %v119 = vunpack.c.l.b16 %v96
    %v120 = vunpack.c.l.b16 %v97
    %v121 = vunpack.c.l.b16 %v98
    %v122 = vunpack.c.l.b16 %v99
    %v123 = vpack.c.b16 %v120, %v119
    %v124 = vpack.c.b16 %v122, %v121
    %v133 = vunpack.c.l.b16 %v100
    %v134 = vunpack.c.l.b16 %v101
    %v135 = vunpack.c.l.b16 %v102
    %v136 = vunpack.c.l.b16 %v103
    %v137 = vunpack.c.l.b16 %v104
    %v138 = vunpack.c.l.b16 %v105
    %v139 = vunpack.c.l.b16 %v106
    %v140 = vunpack.c.l.b16 %v107
    %v141 = vpack.c.b16 %v134, %v133
    %v142 = vpack.c.b16 %v136, %v135
    %v143 = vpack.c.b16 %v138, %v137
    %v144 = vpack.c.b16 %v140, %v139
    %vm149 = vcmask 523264
    %v151 = vsel %vm149, %v123, 0
    %v154 = vsel %vm149, %v124, 0
    %156 = vmatprep.subr.bf16.mxu0 0
    %157 = vmatpush1.bf16.msra.mxu0 %v141
    %158 = vmatprep.subr.bf16.mxu0 0
    %159 = vmatpush1.bf16.msra.mxu0 %v142
    %160 = vmatprep.subr.bf16.mxu0 0
    %161 = vmatpush1.bf16.msra.mxu0 %v143
    %162 = vmatprep.subr.bf16.mxu0 0
    %163 = vmatpush1.bf16.msra.mxu0 %v144
    %164 = vmatprep.subr.bf16.mxu0 0
    %165 = vmatpush1.bf16.msra.mxu0 0
    %166 = vmatprep.subr.bf16.mxu0 0
    %167 = vmatpush1.bf16.msra.mxu0 0
    %168 = vmatprep.subr.bf16.mxu0 0
    %169 = vmatpush1.bf16.msra.mxu0 0
    %170 = vmatprep.subr.bf16.mxu0 0
    %171 = vmatpush1.bf16.msra.mxu0 0
    %172 = vmatprep.subr.bf16.mxu0 0
    %173 = vmatpush1.bf16.msra.mxu0 0
    %174 = vmatprep.subr.bf16.mxu0 0
    %175 = vmatpush1.bf16.msra.mxu0 0
    %176 = vmatprep.subr.bf16.mxu0 0
    %177 = vmatpush1.bf16.msra.mxu0 0
    %178 = vmatprep.subr.bf16.mxu0 0
    %179 = vmatpush1.bf16.msra.mxu0 0
    %180 = vmatprep.subr.bf16.mxu0 0
    %181 = vmatpush1.bf16.msra.mxu0 0
    %182 = vmatprep.subr.bf16.mxu0 0
    %183 = vmatpush1.bf16.msra.mxu0 0
    %184 = vmatprep.subr.bf16.mxu0 0
    %185 = vmatpush1.bf16.msra.mxu0 0
    %186 = vmatprep.subr.bf16.mxu0 0
    %187 = vmatpush1.bf16.msra.mxu0 0
    %188 = vmatprep.mubr.bf16.mxu0 0
    %189 = vmatmul.mubr.bf16.gmra.mrb[0].mxu0 %v151
    %v190 = vpop.f32.mrb[0].mxu0
    %v191 = vadd.f32 %v113, %v190
    %v192 = vpop.f32.mrb[0].mxu0
    %v193 = vpop.f32.mrb[0].mxu0
    %v194 = vadd.f32 %v113, %v193
    %v195 = vpop.f32.mrb[0].mxu0
    %196 = vmatprep.mubr.bf16.mxu0 0
    %197 = vmatmul.mubr.bf16.gmra.mrb[0].mxu0 %v154
    %v198 = vpop.f32.mrb[0].mxu0
    %v199 = vadd.f32 %v113, %v198
    %v200 = vpop.f32.mrb[0].mxu0
    %v201 = vpop.f32.mrb[0].mxu0
    %v202 = vadd.f32 %v113, %v201
    %v203 = vpop.f32.mrb[0].mxu0
    %204 = vdwg.mxu0
    %205 = vst [vmem:[#allocation2] sm:$0xff] %v191
    %206 = vst [vmem:[#allocation2 + $0x8] sm:$0xff] %v194
    %207 = vst [vmem:[#allocation2 + $0x10] sm:$0xff] %v199
    %208 = vst [vmem:[#allocation2 + $0x18] sm:$0xff] %v202
    %v209 = vld [vmem:[#allocation10] sm:$0xf]
    %v210 = vld [vmem:[#allocation10 + $0x4] sm:$0xf]
    %v211 = vld [vmem:[#allocation10 + $0x8] sm:$0xf]
    %v212 = vld [vmem:[#allocation10 + $0xc] sm:$0xf]
    %v213 = vld [vmem:[#allocation10 + $0x10] sm:$0xf]
    %v214 = vld [vmem:[#allocation10 + $0x14] sm:$0xf]
    %v215 = vld [vmem:[#allocation10 + $0x18] sm:$0xf]
    %v216 = vld [vmem:[#allocation10 + $0x1c] sm:$0xf]
    %v217 = vld [vmem:[#allocation10 + $0x20] sm:$0xf]
    %v218 = vld [vmem:[#allocation10 + $0x24] sm:$0xf]
    %v219 = vld [vmem:[#allocation10 + $0x28] sm:$0xf]
    %v220 = vld [vmem:[#allocation10 + $0x2c] sm:$0xf]
    %v221 = vld [vmem:[#allocation10 + $0x30] sm:$0xf]
    %v222 = vld [vmem:[#allocation10 + $0x34] sm:$0xf]
    %v223 = vld [vmem:[#allocation10 + $0x38] sm:$0xf]
    %v224 = vld [vmem:[#allocation10 + $0x3c] sm:$0xf]
    %v225 = vld [vmem:[#allocation2] sm:$0xf]
    %v242 = vunpack.c.l.b16 %v209
    %v243 = vunpack.c.l.b16 %v210
    %v244 = vunpack.c.l.b16 %v211
    %v245 = vunpack.c.l.b16 %v212
    %v246 = vunpack.c.l.b16 %v213
    %v247 = vunpack.c.l.b16 %v214
    %v248 = vunpack.c.l.b16 %v215
    %v249 = vunpack.c.l.b16 %v216
    %v250 = vunpack.c.l.b16 %v217
    %v251 = vunpack.c.l.b16 %v218
    %v252 = vunpack.c.l.b16 %v219
    %v253 = vunpack.c.l.b16 %v220
    %v254 = vunpack.c.l.b16 %v221
    %v255 = vunpack.c.l.b16 %v222
    %v256 = vunpack.c.l.b16 %v223
    %v257 = vunpack.c.l.b16 %v224
    %v258 = vpack.c.b16 %v243, %v242
    %v259 = vpack.c.b16 %v245, %v244
    %v260 = vpack.c.b16 %v247, %v246
    %v261 = vpack.c.b16 %v249, %v248
    %v262 = vpack.c.b16 %v251, %v250
    %v263 = vpack.c.b16 %v253, %v252
    %v264 = vpack.c.b16 %v255, %v254
    %v265 = vpack.c.b16 %v257, %v256
    %274 = vmatprep.subr.bf16.mxu0 0
    %275 = vmatpush1.bf16.msra.mxu0 %v258
    %276 = vmatprep.subr.bf16.mxu0 0
    %277 = vmatpush1.bf16.msra.mxu0 %v259
    %278 = vmatprep.subr.bf16.mxu0 0
    %279 = vmatpush1.bf16.msra.mxu0 %v260
    %280 = vmatprep.subr.bf16.mxu0 0
    %281 = vmatpush1.bf16.msra.mxu0 %v261
    %282 = vmatprep.subr.bf16.mxu0 0
    %283 = vmatpush1.bf16.msra.mxu0 %v262
    %284 = vmatprep.subr.bf16.mxu0 0
    %285 = vmatpush1.bf16.msra.mxu0 %v263
    %286 = vmatprep.subr.bf16.mxu0 0
    %287 = vmatpush1.bf16.msra.mxu0 %v264
    %288 = vmatprep.subr.bf16.mxu0 0
    %289 = vmatpush1.bf16.msra.mxu0 %v265
    %290 = vmatprep.subr.bf16.mxu0 0
    %291 = vmatpush1.bf16.msra.mxu0 0
    %292 = vmatprep.subr.bf16.mxu0 0
    %293 = vmatpush1.bf16.msra.mxu0 0
    %294 = vmatprep.subr.bf16.mxu0 0
    %295 = vmatpush1.bf16.msra.mxu0 0
    %296 = vmatprep.subr.bf16.mxu0 0
    %297 = vmatpush1.bf16.msra.mxu0 0
    %298 = vmatprep.subr.bf16.mxu0 0
    %299 = vmatpush1.bf16.msra.mxu0 0
    %300 = vmatprep.subr.bf16.mxu0 0
    %301 = vmatpush1.bf16.msra.mxu0 0
    %302 = vmatprep.subr.bf16.mxu0 0
    %303 = vmatpush1.bf16.msra.mxu0 0
    %304 = vmatprep.subr.bf16.mxu0 0
    %305 = vmatpush1.bf16.msra.mxu0 0
    %306 = vmatprep.mubr.bf16.mxu0 0
    %307 = vmatmul.mubr.bf16.gmra.mrb[0].mxu0 0
    %v308 = vpop.f32.mrb[0].mxu0
    %v309 = vadd.f32 0.0, %v308
    %v310 = vpop.f32.mrb[0].mxu0
    %v311 = vpop.f32.mrb[0].mxu0
    %v312 = vpop.f32.mrb[0].mxu0
    %313 = vdwg.mxu0
    %v314 = vadd.f32 %v225, %v309
    %v315 = vtanh.pop %v314
    %316 = vst [vmem:[#allocation2] sm:$0xf] %v315
    %v317 = vld [vmem:[#allocation2 + $0x4] sm:$0xf]
    %v318 = vpack.c.bf16 %v315, %v315
    %319 = vmatprep.subr.bf16.mxu0 0
    %320 = vmatpush1.bf16.msra.mxu0 %v258
    %321 = vmatprep.subr.bf16.mxu0 0
    %322 = vmatpush1.bf16.msra.mxu0 %v259
    %323 = vmatprep.subr.bf16.mxu0 0
    %324 = vmatpush1.bf16.msra.mxu0 %v260
    %325 = vmatprep.subr.bf16.mxu0 0
    %326 = vmatpush1.bf16.msra.mxu0 %v261
    %327 = vmatprep.subr.bf16.mxu0 0
    %328 = vmatpush1.bf16.msra.mxu0 %v262
    %329 = vmatprep.subr.bf16.mxu0 0
    %330 = vmatpush1.bf16.msra.mxu0 %v263
    %331 = vmatprep.subr.bf16.mxu0 0
    %332 = vmatpush1.bf16.msra.mxu0 %v264
    %333 = vmatprep.subr.bf16.mxu0 0
    %334 = vmatpush1.bf16.msra.mxu0 %v265
    %335 = vmatprep.subr.bf16.mxu0 0
    %336 = vmatpush1.bf16.msra.mxu0 0
    %337 = vmatprep.subr.bf16.mxu0 0
    %338 = vmatpush1.bf16.msra.mxu0 0
    %339 = vmatprep.subr.bf16.mxu0 0
    %340 = vmatpush1.bf16.msra.mxu0 0
    %341 = vmatprep.subr.bf16.mxu0 0
    %342 = vmatpush1.bf16.msra.mxu0 0
    %343 = vmatprep.subr.bf16.mxu0 0
    %344 = vmatpush1.bf16.msra.mxu0 0
    %345 = vmatprep.subr.bf16.mxu0 0
    %346 = vmatpush1.bf16.msra.mxu0 0
    %347 = vmatprep.subr.bf16.mxu0 0
    %348 = vmatpush1.bf16.msra.mxu0 0
    %349 = vmatprep.subr.bf16.mxu0 0
    %350 = vmatpush1.bf16.msra.mxu0 0
    %351 = vmatprep.mubr.bf16.mxu0 0
    %352 = vmatmul.mubr.bf16.gmra.mrb[0].mxu0 %v318
    %v353 = vpop.f32.mrb[0].mxu0
    %v354 = vadd.f32 0.0, %v353
    %v355 = vpop.f32.mrb[0].mxu0
    %v356 = vpop.f32.mrb[0].mxu0
    %v357 = vpop.f32.mrb[0].mxu0
    %358 = vdwg.mxu0
    %v359 = vadd.f32 %v317, %v354
    %v360 = vtanh.pop %v359
    %361 = vst [vmem:[#allocation2 + $0x4] sm:$0xf] %v360
    %v362 = vld [vmem:[#allocation2 + $0x8] sm:$0xf]
    %v363 = vpack.c.bf16 %v360, %v360
    %364 = vmatprep.subr.bf16.mxu0 0
    %365 = vmatpush1.bf16.msra.mxu0 %v258
    %366 = vmatprep.subr.bf16.mxu0 0
    %367 = vmatpush1.bf16.msra.mxu0 %v259
    %368 = vmatprep.subr.bf16.mxu0 0
    %369 = vmatpush1.bf16.msra.mxu0 %v260
    %370 = vmatprep.subr.bf16.mxu0 0
    %371 = vmatpush1.bf16.msra.mxu0 %v261
    %372 = vmatprep.subr.bf16.mxu0 0
    %373 = vmatpush1.bf16.msra.mxu0 %v262
    %374 = vmatprep.subr.bf16.mxu0 0
    %375 = vmatpush1.bf16.msra.mxu0 %v263
    %376 = vmatprep.subr.bf16.mxu0 0
    %377 = vmatpush1.bf16.msra.mxu0 %v264
    %378 = vmatprep.subr.bf16.mxu0 0
    %379 = vmatpush1.bf16.msra.mxu0 %v265
    %380 = vmatprep.subr.bf16.mxu0 0
    %381 = vmatpush1.bf16.msra.mxu0 0
    %382 = vmatprep.subr.bf16.mxu0 0
    %383 = vmatpush1.bf16.msra.mxu0 0
    %384 = vmatprep.subr.bf16.mxu0 0
    %385 = vmatpush1.bf16.msra.mxu0 0
    %386 = vmatprep.subr.bf16.mxu0 0
    %387 = vmatpush1.bf16.msra.mxu0 0
    %388 = vmatprep.subr.bf16.mxu0 0
    %389 = vmatpush1.bf16.msra.mxu0 0
    %390 = vmatprep.subr.bf16.mxu0 0
    %391 = vmatpush1.bf16.msra.mxu0 0
    %392 = vmatprep.subr.bf16.mxu0 0
    %393 = vmatpush1.bf16.msra.mxu0 0
    %394 = vmatprep.subr.bf16.mxu0 0
    %395 = vmatpush1.bf16.msra.mxu0 0
    %396 = vmatprep.mubr.bf16.mxu0 0
    %397 = vmatmul.mubr.bf16.gmra.mrb[0].mxu0 %v363
    %v398 = vpop.f32.mrb[0].mxu0
    %v399 = vadd.f32 0.0, %v398
    %v400 = vpop.f32.mrb[0].mxu0
    %v401 = vpop.f32.mrb[0].mxu0
    %v402 = vpop.f32.mrb[0].mxu0
    %403 = vdwg.mxu0
    %v404 = vadd.f32 %v362, %v399
    %v405 = vtanh.pop %v404
    %406 = vst [vmem:[#allocation2 + $0x8] sm:$0xf] %v405
    %v407 = vld [vmem:[#allocation2 + $0xc] sm:$0xf]
    %v408 = vpack.c.bf16 %v405, %v405
    %409 = vmatprep.subr.bf16.mxu0 0
    %410 = vmatpush1.bf16.msra.mxu0 %v258
    %411 = vmatprep.subr.bf16.mxu0 0
    %412 = vmatpush1.bf16.msra.mxu0 %v259
    %413 = vmatprep.subr.bf16.mxu0 0
    %414 = vmatpush1.bf16.msra.mxu0 %v260
    %415 = vmatprep.subr.bf16.mxu0 0
    %416 = vmatpush1.bf16.msra.mxu0 %v261
    %417 = vmatprep.subr.bf16.mxu0 0
    %418 = vmatpush1.bf16.msra.mxu0 %v262
    %419 = vmatprep.subr.bf16.mxu0 0
    %420 = vmatpush1.bf16.msra.mxu0 %v263
    %421 = vmatprep.subr.bf16.mxu0 0
    %422 = vmatpush1.bf16.msra.mxu0 %v264
    %423 = vmatprep.subr.bf16.mxu0 0
    %424 = vmatpush1.bf16.msra.mxu0 %v265
    %425 = vmatprep.subr.bf16.mxu0 0
    %426 = vmatpush1.bf16.msra.mxu0 0
    %427 = vmatprep.subr.bf16.mxu0 0
    %428 = vmatpush1.bf16.msra.mxu0 0
    %429 = vmatprep.subr.bf16.mxu0 0
    %430 = vmatpush1.bf16.msra.mxu0 0
    %431 = vmatprep.subr.bf16.mxu0 0
    %432 = vmatpush1.bf16.msra.mxu0 0
    %433 = vmatprep.subr.bf16.mxu0 0
    %434 = vmatpush1.bf16.msra.mxu0 0
    %435 = vmatprep.subr.bf16.mxu0 0
    %436 = vmatpush1.bf16.msra.mxu0 0
    %437 = vmatprep.subr.bf16.mxu0 0
    %438 = vmatpush1.bf16.msra.mxu0 0
    %439 = vmatprep.subr.bf16.mxu0 0
    %440 = vmatpush1.bf16.msra.mxu0 0
    %441 = vmatprep.mubr.bf16.mxu0 0
    %442 = vmatmul.mubr.bf16.gmra.mrb[0].mxu0 %v408
    %v443 = vpop.f32.mrb[0].mxu0
    %v444 = vadd.f32 0.0, %v443
    %v445 = vpop.f32.mrb[0].mxu0
    %v446 = vpop.f32.mrb[0].mxu0
    %v447 = vpop.f32.mrb[0].mxu0
    %448 = vdwg.mxu0
    %v449 = vadd.f32 %v407, %v444
    %v450 = vtanh.pop %v449
    %451 = vst [vmem:[#allocation2 + $0xc] sm:$0xf] %v450
    %v452 = vld [vmem:[#allocation2 + $0x10] sm:$0xf]
    %v453 = vpack.c.bf16 %v450, %v450
    %454 = vmatprep.subr.bf16.mxu0 0
    %455 = vmatpush1.bf16.msra.mxu0 %v258
    %456 = vmatprep.subr.bf16.mxu0 0
    %457 = vmatpush1.bf16.msra.mxu0 %v259
    %458 = vmatprep.subr.bf16.mxu0 0
    %459 = vmatpush1.bf16.msra.mxu0 %v260
    %460 = vmatprep.subr.bf16.mxu0 0
    %461 = vmatpush1.bf16.msra.mxu0 %v261
    %462 = vmatprep.subr.bf16.mxu0 0
    %463 = vmatpush1.bf16.msra.mxu0 %v262
    %464 = vmatprep.subr.bf16.mxu0 0
    %465 = vmatpush1.bf16.msra.mxu0 %v263
    %466 = vmatprep.subr.bf16.mxu0 0
    %467 = vmatpush1.bf16.msra.mxu0 %v264
    %468 = vmatprep.subr.bf16.mxu0 0
    %469 = vmatpush1.bf16.msra.mxu0 %v265
    %470 = vmatprep.subr.bf16.mxu0 0
    %471 = vmatpush1.bf16.msra.mxu0 0
    %472 = vmatprep.subr.bf16.mxu0 0
    %473 = vmatpush1.bf16.msra.mxu0 0
    %474 = vmatprep.subr.bf16.mxu0 0
    %475 = vmatpush1.bf16.msra.mxu0 0
    %476 = vmatprep.subr.bf16.mxu0 0
    %477 = vmatpush1.bf16.msra.mxu0 0
    %478 = vmatprep.subr.bf16.mxu0 0
    %479 = vmatpush1.bf16.msra.mxu0 0
    %480 = vmatprep.subr.bf16.mxu0 0
    %481 = vmatpush1.bf16.msra.mxu0 0
    %482 = vmatprep.subr.bf16.mxu0 0
    %483 = vmatpush1.bf16.msra.mxu0 0
    %484 = vmatprep.subr.bf16.mxu0 0
    %485 = vmatpush1.bf16.msra.mxu0 0
    %486 = vmatprep.mubr.bf16.mxu0 0
    %487 = vmatmul.mubr.bf16.gmra.mrb[0].mxu0 %v453
    %v488 = vpop.f32.mrb[0].mxu0
    %v489 = vadd.f32 0.0, %v488
    %v490 = vpop.f32.mrb[0].mxu0
    %v491 = vpop.f32.mrb[0].mxu0
    %v492 = vpop.f32.mrb[0].mxu0
    %493 = vdwg.mxu0
    %v494 = vadd.f32 %v452, %v489
    %v495 = vtanh.pop %v494
    %496 = vst [vmem:[#allocation2 + $0x10] sm:$0xf] %v495
    %v497 = vld [vmem:[#allocation2 + $0x14] sm:$0xf]
    %v498 = vpack.c.bf16 %v495, %v495
    %499 = vmatprep.subr.bf16.mxu0 0
    %500 = vmatpush1.bf16.msra.mxu0 %v258
    %501 = vmatprep.subr.bf16.mxu0 0
    %502 = vmatpush1.bf16.msra.mxu0 %v259
    %503 = vmatprep.subr.bf16.mxu0 0
    %504 = vmatpush1.bf16.msra.mxu0 %v260
    %505 = vmatprep.subr.bf16.mxu0 0
    %506 = vmatpush1.bf16.msra.mxu0 %v261
    %507 = vmatprep.subr.bf16.mxu0 0
    %508 = vmatpush1.bf16.msra.mxu0 %v262
    %509 = vmatprep.subr.bf16.mxu0 0
    %510 = vmatpush1.bf16.msra.mxu0 %v263
    %511 = vmatprep.subr.bf16.mxu0 0
    %512 = vmatpush1.bf16.msra.mxu0 %v264
    %513 = vmatprep.subr.bf16.mxu0 0
    %514 = vmatpush1.bf16.msra.mxu0 %v265
    %515 = vmatprep.subr.bf16.mxu0 0
    %516 = vmatpush1.bf16.msra.mxu0 0
    %517 = vmatprep.subr.bf16.mxu0 0
    %518 = vmatpush1.bf16.msra.mxu0 0
    %519 = vmatprep.subr.bf16.mxu0 0
    %520 = vmatpush1.bf16.msra.mxu0 0
    %521 = vmatprep.subr.bf16.mxu0 0
    %522 = vmatpush1.bf16.msra.mxu0 0
    %523 = vmatprep.subr.bf16.mxu0 0
    %524 = vmatpush1.bf16.msra.mxu0 0
    %525 = vmatprep.subr.bf16.mxu0 0
    %526 = vmatpush1.bf16.msra.mxu0 0
    %527 = vmatprep.subr.bf16.mxu0 0
    %528 = vmatpush1.bf16.msra.mxu0 0
    %529 = vmatprep.subr.bf16.mxu0 0
    %530 = vmatpush1.bf16.msra.mxu0 0
    %531 = vmatprep.mubr.bf16.mxu0 0
    %532 = vmatmul.mubr.bf16.gmra.mrb[0].mxu0 %v498
    %v533 = vpop.f32.mrb[0].mxu0
    %v534 = vadd.f32 0.0, %v533
    %v535 = vpop.f32.mrb[0].mxu0
    %v536 = vpop.f32.mrb[0].mxu0
    %v537 = vpop.f32.mrb[0].mxu0
    %538 = vdwg.mxu0
    %v539 = vadd.f32 %v497, %v534
    %v540 = vtanh.pop %v539
    %541 = vst [vmem:[#allocation2 + $0x14] sm:$0xf] %v540
    %v542 = vld [vmem:[#allocation2 + $0x18] sm:$0xf]
    %v543 = vpack.c.bf16 %v540, %v540
    %544 = vmatprep.subr.bf16.mxu0 0
    %545 = vmatpush1.bf16.msra.mxu0 %v258
    %546 = vmatprep.subr.bf16.mxu0 0
    %547 = vmatpush1.bf16.msra.mxu0 %v259
    %548 = vmatprep.subr.bf16.mxu0 0
    %549 = vmatpush1.bf16.msra.mxu0 %v260
    %550 = vmatprep.subr.bf16.mxu0 0
    %551 = vmatpush1.bf16.msra.mxu0 %v261
    %552 = vmatprep.subr.bf16.mxu0 0
    %553 = vmatpush1.bf16.msra.mxu0 %v262
    %554 = vmatprep.subr.bf16.mxu0 0
    %555 = vmatpush1.bf16.msra.mxu0 %v263
    %556 = vmatprep.subr.bf16.mxu0 0
    %557 = vmatpush1.bf16.msra.mxu0 %v264
    %558 = vmatprep.subr.bf16.mxu0 0
    %559 = vmatpush1.bf16.msra.mxu0 %v265
    %560 = vmatprep.subr.bf16.mxu0 0
    %561 = vmatpush1.bf16.msra.mxu0 0
    %562 = vmatprep.subr.bf16.mxu0 0
    %563 = vmatpush1.bf16.msra.mxu0 0
    %564 = vmatprep.subr.bf16.mxu0 0
    %565 = vmatpush1.bf16.msra.mxu0 0
    %566 = vmatprep.subr.bf16.mxu0 0
    %567 = vmatpush1.bf16.msra.mxu0 0
    %568 = vmatprep.subr.bf16.mxu0 0
    %569 = vmatpush1.bf16.msra.mxu0 0
    %570 = vmatprep.subr.bf16.mxu0 0
    %571 = vmatpush1.bf16.msra.mxu0 0
    %572 = vmatprep.subr.bf16.mxu0 0
    %573 = vmatpush1.bf16.msra.mxu0 0
    %574 = vmatprep.subr.bf16.mxu0 0
    %575 = vmatpush1.bf16.msra.mxu0 0
    %576 = vmatprep.mubr.bf16.mxu0 0
    %577 = vmatmul.mubr.bf16.gmra.mrb[0].mxu0 %v543
    %v578 = vpop.f32.mrb[0].mxu0
    %v579 = vadd.f32 0.0, %v578
    %v580 = vpop.f32.mrb[0].mxu0
    %v581 = vpop.f32.mrb[0].mxu0
    %v582 = vpop.f32.mrb[0].mxu0
    %583 = vdwg.mxu0
    %v584 = vadd.f32 %v542, %v579
    %v585 = vtanh.pop %v584
    %586 = vst [vmem:[#allocation2 + $0x18] sm:$0xf] %v585
    %v587 = vld [vmem:[#allocation2 + $0x1c] sm:$0xf]
    %v588 = vpack.c.bf16 %v585, %v585
    %589 = vmatprep.subr.bf16.mxu0 0
    %590 = vmatpush1.bf16.msra.mxu0 %v258
    %591 = vmatprep.subr.bf16.mxu0 0
    %592 = vmatpush1.bf16.msra.mxu0 %v259
    %593 = vmatprep.subr.bf16.mxu0 0
    %594 = vmatpush1.bf16.msra.mxu0 %v260
    %595 = vmatprep.subr.bf16.mxu0 0
    %596 = vmatpush1.bf16.msra.mxu0 %v261
    %597 = vmatprep.subr.bf16.mxu0 0
    %598 = vmatpush1.bf16.msra.mxu0 %v262
    %599 = vmatprep.subr.bf16.mxu0 0
    %600 = vmatpush1.bf16.msra.mxu0 %v263
    %601 = vmatprep.subr.bf16.mxu0 0
    %602 = vmatpush1.bf16.msra.mxu0 %v264
    %603 = vmatprep.subr.bf16.mxu0 0
    %604 = vmatpush1.bf16.msra.mxu0 %v265
    %605 = vmatprep.subr.bf16.mxu0 0
    %606 = vmatpush1.bf16.msra.mxu0 0
    %607 = vmatprep.subr.bf16.mxu0 0
    %608 = vmatpush1.bf16.msra.mxu0 0
    %609 = vmatprep.subr.bf16.mxu0 0
    %610 = vmatpush1.bf16.msra.mxu0 0
    %611 = vmatprep.subr.bf16.mxu0 0
    %612 = vmatpush1.bf16.msra.mxu0 0
    %613 = vmatprep.subr.bf16.mxu0 0
    %614 = vmatpush1.bf16.msra.mxu0 0
    %615 = vmatprep.subr.bf16.mxu0 0
    %616 = vmatpush1.bf16.msra.mxu0 0
    %617 = vmatprep.subr.bf16.mxu0 0
    %618 = vmatpush1.bf16.msra.mxu0 0
    %619 = vmatprep.subr.bf16.mxu0 0
    %620 = vmatpush1.bf16.msra.mxu0 0
    %621 = vmatprep.mubr.bf16.mxu0 0
    %622 = vmatmul.mubr.bf16.gmra.mrb[0].mxu0 %v588
    %v623 = vpop.f32.mrb[0].mxu0
    %v624 = vadd.f32 0.0, %v623
    %v625 = vpop.f32.mrb[0].mxu0
    %v626 = vpop.f32.mrb[0].mxu0
    %v627 = vpop.f32.mrb[0].mxu0
    %628 = vdwg.mxu0
    %v629 = vadd.f32 %v587, %v624
    %v630 = vtanh.pop %v629
    %631 = vst [vmem:[#allocation2 + $0x1c] sm:$0xf] %v630
    %v632 = vld [vmem:[#allocation2] sm:$0xff]
    %v633 = vld [vmem:[#allocation2 + $0x8] sm:$0xff]
    %v634 = vld [vmem:[#allocation2 + $0x10] sm:$0xff]
    %v635 = vld [vmem:[#allocation2 + $0x18] sm:$0xff]
    %v636 = vpack.c.bf16 %v633, %v632
    %v637 = vpack.c.bf16 %v635, %v634
    %v638 = vld [vmem:[#allocation9] sm:$0xf]
    %v639 = vld [vmem:[#allocation9 + $0x4] sm:$0xf]
    %v640 = vld [vmem:[#allocation9 + $0x8] sm:$0xf]
    %v641 = vld [vmem:[#allocation9 + $0xc] sm:$0xf]
    %v642 = vld [vmem:[#allocation9 + $0x10] sm:$0xf]
    %v643 = vld [vmem:[#allocation9 + $0x14] sm:$0xf]
    %v644 = vld [vmem:[#allocation9 + $0x18] sm:$0xf]
    %v645 = vld [vmem:[#allocation9 + $0x1c] sm:$0xf]
    %v646 = vld [vmem:[#allocation9 + $0x20] sm:$0xf]
    %v647 = vld [vmem:[#allocation9 + $0x24] sm:$0xf]
    %v648 = vld [vmem:[#allocation9 + $0x28] sm:$0xf]
    %v649 = vld [vmem:[#allocation9 + $0x2c] sm:$0xf]
    %v650 = vld [vmem:[#allocation9 + $0x30] sm:$0xf]
    %v651 = vld [vmem:[#allocation9 + $0x34] sm:$0xf]
    %v652 = vld [vmem:[#allocation9 + $0x38] sm:$0xf]
    %v653 = vld [vmem:[#allocation9 + $0x3c] sm:$0xf]
    %s654 = scalar_lea.vmem %s4, 1
    %v655 = vld [vmem:[%s654] sm:$0x1]
    %v657 = vlaneseq
    %v658 = vshrl.u32 %v657, 7
    %v659 = vsub.s32 0, %v658
    %v660 = vrot.slane %v655, %v659
    %v678 = vunpack.c.l.b16 %v638
    %v679 = vunpack.c.l.b16 %v639
    %v680 = vunpack.c.l.b16 %v640
    %v681 = vunpack.c.l.b16 %v641
    %v682 = vunpack.c.l.b16 %v642
    %v683 = vunpack.c.l.b16 %v643
    %v684 = vunpack.c.l.b16 %v644
    %v685 = vunpack.c.l.b16 %v645
    %v686 = vunpack.c.l.b16 %v646
    %v687 = vunpack.c.l.b16 %v647
    %v688 = vunpack.c.l.b16 %v648
    %v689 = vunpack.c.l.b16 %v649
    %v690 = vunpack.c.l.b16 %v650
    %v691 = vunpack.c.l.b16 %v651
    %v692 = vunpack.c.l.b16 %v652
    %v693 = vunpack.c.l.b16 %v653
    %v694 = vpack.c.b16 %v679, %v678
    %v695 = vpack.c.b16 %v681, %v680
    %v696 = vpack.c.b16 %v683, %v682
    %v697 = vpack.c.b16 %v685, %v684
    %v698 = vpack.c.b16 %v687, %v686
    %v699 = vpack.c.b16 %v689, %v688
    %v700 = vpack.c.b16 %v691, %v690
    %v701 = vpack.c.b16 %v693, %v692
    %710 = vmatprep.subr.bf16.mxu0 0
    %711 = vmatpush1.bf16.msra.mxu0 %v694
    %712 = vmatprep.subr.bf16.mxu0 0
    %713 = vmatpush1.bf16.msra.mxu0 %v695
    %714 = vmatprep.subr.bf16.mxu0 0
    %715 = vmatpush1.bf16.msra.mxu0 %v696
    %716 = vmatprep.subr.bf16.mxu0 0
    %717 = vmatpush1.bf16.msra.mxu0 %v697
    %718 = vmatprep.subr.bf16.mxu0 0
    %719 = vmatpush1.bf16.msra.mxu0 %v698
    %720 = vmatprep.subr.bf16.mxu0 0
    %721 = vmatpush1.bf16.msra.mxu0 %v699
    %722 = vmatprep.subr.bf16.mxu0 0
    %723 = vmatpush1.bf16.msra.mxu0 %v700
    %724 = vmatprep.subr.bf16.mxu0 0
    %725 = vmatpush1.bf16.msra.mxu0 %v701
    %726 = vmatprep.subr.bf16.mxu0 0
    %727 = vmatpush1.bf16.msra.mxu0 0
    %728 = vmatprep.subr.bf16.mxu0 0
    %729 = vmatpush1.bf16.msra.mxu0 0
    %730 = vmatprep.subr.bf16.mxu0 0
    %731 = vmatpush1.bf16.msra.mxu0 0
    %732 = vmatprep.subr.bf16.mxu0 0
    %733 = vmatpush1.bf16.msra.mxu0 0
    %734 = vmatprep.subr.bf16.mxu0 0
    %735 = vmatpush1.bf16.msra.mxu0 0
    %736 = vmatprep.subr.bf16.mxu0 0
    %737 = vmatpush1.bf16.msra.mxu0 0
    %738 = vmatprep.subr.bf16.mxu0 0
    %739 = vmatpush1.bf16.msra.mxu0 0
    %740 = vmatprep.subr.bf16.mxu0 0
    %741 = vmatpush1.bf16.msra.mxu0 0
    %742 = vmatprep.mubr.bf16.mxu0 0
    %743 = vmatmul.mubr.bf16.gmra.mrb[0].mxu0 %v636
    %v744 = vpop.f32.mrb[0].mxu0
    %v745 = vadd.f32 %v660, %v744
    %v746 = vpop.f32.mrb[0].mxu0
    %v747 = vpop.f32.mrb[0].mxu0
    %v748 = vadd.f32 %v660, %v747
    %v749 = vpop.f32.mrb[0].mxu0
    %750 = vmatprep.mubr.bf16.mxu0 0
    %751 = vmatmul.mubr.bf16.gmra.mrb[0].mxu0 %v637
    %v752 = vpop.f32.mrb[0].mxu0
    %v753 = vadd.f32 %v660, %v752
    %v754 = vpop.f32.mrb[0].mxu0
    %v755 = vpop.f32.mrb[0].mxu0
    %v756 = vadd.f32 %v660, %v755
    %v757 = vpop.f32.mrb[0].mxu0
    %758 = vdwg.mxu0
    %759 = vst [vmem:[#allocation3] sm:$0xff] %v745
    %760 = vst [vmem:[#allocation3 + $0x8] sm:$0xff] %v748
    %761 = vst [vmem:[#allocation3 + $0x10] sm:$0xff] %v753
    %762 = vst [vmem:[#allocation3 + $0x18] sm:$0xff] %v756
    %s763 = scalar_lea.vmem [#allocation10], 64
    %v764 = vld [vmem:[%s763] sm:$0xf]
    %v765 = vld [vmem:[%s763 + $0x4] sm:$0xf]
    %v766 = vld [vmem:[%s763 + $0x8] sm:$0xf]
    %v767 = vld [vmem:[%s763 + $0xc] sm:$0xf]
    %v768 = vld [vmem:[%s763 + $0x10] sm:$0xf]
    %v769 = vld [vmem:[%s763 + $0x14] sm:$0xf]
    %v770 = vld [vmem:[%s763 + $0x18] sm:$0xf]
    %v771 = vld [vmem:[%s763 + $0x1c] sm:$0xf]
    %v772 = vld [vmem:[%s763 + $0x20] sm:$0xf]
    %v773 = vld [vmem:[%s763 + $0x24] sm:$0xf]
    %v774 = vld [vmem:[%s763 + $0x28] sm:$0xf]
    %v775 = vld [vmem:[%s763 + $0x2c] sm:$0xf]
    %v776 = vld [vmem:[%s763 + $0x30] sm:$0xf]
    %v777 = vld [vmem:[%s763 + $0x34] sm:$0xf]
    %v778 = vld [vmem:[%s763 + $0x38] sm:$0xf]
    %v779 = vld [vmem:[%s763 + $0x3c] sm:$0xf]
    %v780 = vld [vmem:[#allocation3] sm:$0xf]
    %v797 = vunpack.c.l.b16 %v764
    %v798 = vunpack.c.l.b16 %v765
    %v799 = vunpack.c.l.b16 %v766
    %v800 = vunpack.c.l.b16 %v767
    %v801 = vunpack.c.l.b16 %v768
    %v802 = vunpack.c.l.b16 %v769
    %v803 = vunpack.c.l.b16 %v770
    %v804 = vunpack.c.l.b16 %v771
    %v805 = vunpack.c.l.b16 %v772
    %v806 = vunpack.c.l.b16 %v773
    %v807 = vunpack.c.l.b16 %v774
    %v808 = vunpack.c.l.b16 %v775
    %v809 = vunpack.c.l.b16 %v776
    %v810 = vunpack.c.l.b16 %v777
    %v811 = vunpack.c.l.b16 %v778
    %v812 = vunpack.c.l.b16 %v779
    %v813 = vpack.c.b16 %v798, %v797
    %v814 = vpack.c.b16 %v800, %v799
    %v815 = vpack.c.b16 %v802, %v801
    %v816 = vpack.c.b16 %v804, %v803
    %v817 = vpack.c.b16 %v806, %v805
    %v818 = vpack.c.b16 %v808, %v807
    %v819 = vpack.c.b16 %v810, %v809
    %v820 = vpack.c.b16 %v812, %v811
    %829 = vmatprep.subr.bf16.mxu0 0
    %830 = vmatpush1.bf16.msra.mxu0 %v813
    %831 = vmatprep.subr.bf16.mxu0 0
    %832 = vmatpush1.bf16.msra.mxu0 %v814
    %833 = vmatprep.subr.bf16.mxu0 0
    %834 = vmatpush1.bf16.msra.mxu0 %v815
    %835 = vmatprep.subr.bf16.mxu0 0
    %836 = vmatpush1.bf16.msra.mxu0 %v816
    %837 = vmatprep.subr.bf16.mxu0 0
    %838 = vmatpush1.bf16.msra.mxu0 %v817
    %839 = vmatprep.subr.bf16.mxu0 0
    %840 = vmatpush1.bf16.msra.mxu0 %v818
    %841 = vmatprep.subr.bf16.mxu0 0
    %842 = vmatpush1.bf16.msra.mxu0 %v819
    %843 = vmatprep.subr.bf16.mxu0 0
    %844 = vmatpush1.bf16.msra.mxu0 %v820
    %845 = vmatprep.subr.bf16.mxu0 0
    %846 = vmatpush1.bf16.msra.mxu0 0
    %847 = vmatprep.subr.bf16.mxu0 0
    %848 = vmatpush1.bf16.msra.mxu0 0
    %849 = vmatprep.subr.bf16.mxu0 0
    %850 = vmatpush1.bf16.msra.mxu0 0
    %851 = vmatprep.subr.bf16.mxu0 0
    %852 = vmatpush1.bf16.msra.mxu0 0
    %853 = vmatprep.subr.bf16.mxu0 0
    %854 = vmatpush1.bf16.msra.mxu0 0
    %855 = vmatprep.subr.bf16.mxu0 0
    %856 = vmatpush1.bf16.msra.mxu0 0
    %857 = vmatprep.subr.bf16.mxu0 0
    %858 = vmatpush1.bf16.msra.mxu0 0
    %859 = vmatprep.subr.bf16.mxu0 0
    %860 = vmatpush1.bf16.msra.mxu0 0
    %861 = vmatprep.mubr.bf16.mxu0 0
    %862 = vmatmul.mubr.bf16.gmra.mrb[0].mxu0 0
    %v863 = vpop.f32.mrb[0].mxu0
    %v864 = vadd.f32 0.0, %v863
    %v865 = vpop.f32.mrb[0].mxu0
    %v866 = vpop.f32.mrb[0].mxu0
    %v867 = vpop.f32.mrb[0].mxu0
    %868 = vdwg.mxu0
    %v869 = vadd.f32 %v780, %v864
    %v870 = vtanh.pop %v869
    %v871 = vld [vmem:[#allocation3 + $0x4] sm:$0xf]
    %v872 = vpack.c.bf16 %v870, %v870
    %873 = vmatprep.subr.bf16.mxu0 0
    %874 = vmatpush1.bf16.msra.mxu0 %v813
    %875 = vmatprep.subr.bf16.mxu0 0
    %876 = vmatpush1.bf16.msra.mxu0 %v814
    %877 = vmatprep.subr.bf16.mxu0 0
    %878 = vmatpush1.bf16.msra.mxu0 %v815
    %879 = vmatprep.subr.bf16.mxu0 0
    %880 = vmatpush1.bf16.msra.mxu0 %v816
    %881 = vmatprep.subr.bf16.mxu0 0
    %882 = vmatpush1.bf16.msra.mxu0 %v817
    %883 = vmatprep.subr.bf16.mxu0 0
    %884 = vmatpush1.bf16.msra.mxu0 %v818
    %885 = vmatprep.subr.bf16.mxu0 0
    %886 = vmatpush1.bf16.msra.mxu0 %v819
    %887 = vmatprep.subr.bf16.mxu0 0
    %888 = vmatpush1.bf16.msra.mxu0 %v820
    %889 = vmatprep.subr.bf16.mxu0 0
    %890 = vmatpush1.bf16.msra.mxu0 0
    %891 = vmatprep.subr.bf16.mxu0 0
    %892 = vmatpush1.bf16.msra.mxu0 0
    %893 = vmatprep.subr.bf16.mxu0 0
    %894 = vmatpush1.bf16.msra.mxu0 0
    %895 = vmatprep.subr.bf16.mxu0 0
    %896 = vmatpush1.bf16.msra.mxu0 0
    %897 = vmatprep.subr.bf16.mxu0 0
    %898 = vmatpush1.bf16.msra.mxu0 0
    %899 = vmatprep.subr.bf16.mxu0 0
    %900 = vmatpush1.bf16.msra.mxu0 0
    %901 = vmatprep.subr.bf16.mxu0 0
    %902 = vmatpush1.bf16.msra.mxu0 0
    %903 = vmatprep.subr.bf16.mxu0 0
    %904 = vmatpush1.bf16.msra.mxu0 0
    %905 = vmatprep.mubr.bf16.mxu0 0
    %906 = vmatmul.mubr.bf16.gmra.mrb[0].mxu0 %v872
    %v907 = vpop.f32.mrb[0].mxu0
    %v908 = vadd.f32 0.0, %v907
    %v909 = vpop.f32.mrb[0].mxu0
    %v910 = vpop.f32.mrb[0].mxu0
    %v911 = vpop.f32.mrb[0].mxu0
    %912 = vdwg.mxu0
    %v913 = vadd.f32 %v871, %v908
    %v914 = vtanh.pop %v913
    %v915 = vld [vmem:[#allocation3 + $0x8] sm:$0xf]
    %v916 = vpack.c.bf16 %v914, %v914
    %917 = vmatprep.subr.bf16.mxu0 0
    %918 = vmatpush1.bf16.msra.mxu0 %v813
    %919 = vmatprep.subr.bf16.mxu0 0
    %920 = vmatpush1.bf16.msra.mxu0 %v814
    %921 = vmatprep.subr.bf16.mxu0 0
    %922 = vmatpush1.bf16.msra.mxu0 %v815
    %923 = vmatprep.subr.bf16.mxu0 0
    %924 = vmatpush1.bf16.msra.mxu0 %v816
    %925 = vmatprep.subr.bf16.mxu0 0
    %926 = vmatpush1.bf16.msra.mxu0 %v817
    %927 = vmatprep.subr.bf16.mxu0 0
    %928 = vmatpush1.bf16.msra.mxu0 %v818
    %929 = vmatprep.subr.bf16.mxu0 0
    %930 = vmatpush1.bf16.msra.mxu0 %v819
    %931 = vmatprep.subr.bf16.mxu0 0
    %932 = vmatpush1.bf16.msra.mxu0 %v820
    %933 = vmatprep.subr.bf16.mxu0 0
    %934 = vmatpush1.bf16.msra.mxu0 0
    %935 = vmatprep.subr.bf16.mxu0 0
    %936 = vmatpush1.bf16.msra.mxu0 0
    %937 = vmatprep.subr.bf16.mxu0 0
    %938 = vmatpush1.bf16.msra.mxu0 0
    %939 = vmatprep.subr.bf16.mxu0 0
    %940 = vmatpush1.bf16.msra.mxu0 0
    %941 = vmatprep.subr.bf16.mxu0 0
    %942 = vmatpush1.bf16.msra.mxu0 0
    %943 = vmatprep.subr.bf16.mxu0 0
    %944 = vmatpush1.bf16.msra.mxu0 0
    %945 = vmatprep.subr.bf16.mxu0 0
    %946 = vmatpush1.bf16.msra.mxu0 0
    %947 = vmatprep.subr.bf16.mxu0 0
    %948 = vmatpush1.bf16.msra.mxu0 0
    %949 = vmatprep.mubr.bf16.mxu0 0
    %950 = vmatmul.mubr.bf16.gmra.mrb[0].mxu0 %v916
    %v951 = vpop.f32.mrb[0].mxu0
    %v952 = vadd.f32 0.0, %v951
    %v953 = vpop.f32.mrb[0].mxu0
    %v954 = vpop.f32.mrb[0].mxu0
    %v955 = vpop.f32.mrb[0].mxu0
    %956 = vdwg.mxu0
    %v957 = vadd.f32 %v915, %v952
    %v958 = vtanh.pop %v957
    %v959 = vld [vmem:[#allocation3 + $0xc] sm:$0xf]
    %v960 = vpack.c.bf16 %v958, %v958
    %961 = vmatprep.subr.bf16.mxu0 0
    %962 = vmatpush1.bf16.msra.mxu0 %v813
    %963 = vmatprep.subr.bf16.mxu0 0
    %964 = vmatpush1.bf16.msra.mxu0 %v814
    %965 = vmatprep.subr.bf16.mxu0 0
    %966 = vmatpush1.bf16.msra.mxu0 %v815
    %967 = vmatprep.subr.bf16.mxu0 0
    %968 = vmatpush1.bf16.msra.mxu0 %v816
    %969 = vmatprep.subr.bf16.mxu0 0
    %970 = vmatpush1.bf16.msra.mxu0 %v817
    %971 = vmatprep.subr.bf16.mxu0 0
    %972 = vmatpush1.bf16.msra.mxu0 %v818
    %973 = vmatprep.subr.bf16.mxu0 0
    %974 = vmatpush1.bf16.msra.mxu0 %v819
    %975 = vmatprep.subr.bf16.mxu0 0
    %976 = vmatpush1.bf16.msra.mxu0 %v820
    %977 = vmatprep.subr.bf16.mxu0 0
    %978 = vmatpush1.bf16.msra.mxu0 0
    %979 = vmatprep.subr.bf16.mxu0 0
    %980 = vmatpush1.bf16.msra.mxu0 0
    %981 = vmatprep.subr.bf16.mxu0 0
    %982 = vmatpush1.bf16.msra.mxu0 0
    %983 = vmatprep.subr.bf16.mxu0 0
    %984 = vmatpush1.bf16.msra.mxu0 0
    %985 = vmatprep.subr.bf16.mxu0 0
    %986 = vmatpush1.bf16.msra.mxu0 0
    %987 = vmatprep.subr.bf16.mxu0 0
    %988 = vmatpush1.bf16.msra.mxu0 0
    %989 = vmatprep.subr.bf16.mxu0 0
    %990 = vmatpush1.bf16.msra.mxu0 0
    %991 = vmatprep.subr.bf16.mxu0 0
    %992 = vmatpush1.bf16.msra.mxu0 0
    %993 = vmatprep.mubr.bf16.mxu0 0
    %994 = vmatmul.mubr.bf16.gmra.mrb[0].mxu0 %v960
    %v995 = vpop.f32.mrb[0].mxu0
    %v996 = vadd.f32 0.0, %v995
    %v997 = vpop.f32.mrb[0].mxu0
    %v998 = vpop.f32.mrb[0].mxu0
    %v999 = vpop.f32.mrb[0].mxu0
    %1000 = vdwg.mxu0
    %v1001 = vadd.f32 %v959, %v996
    %v1002 = vtanh.pop %v1001
    %v1003 = vld [vmem:[#allocation3 + $0x10] sm:$0xf]
    %v1004 = vpack.c.bf16 %v1002, %v1002
    %1005 = vmatprep.subr.bf16.mxu0 0
    %1006 = vmatpush1.bf16.msra.mxu0 %v813
    %1007 = vmatprep.subr.bf16.mxu0 0
    %1008 = vmatpush1.bf16.msra.mxu0 %v814
    %1009 = vmatprep.subr.bf16.mxu0 0
    %1010 = vmatpush1.bf16.msra.mxu0 %v815
    %1011 = vmatprep.subr.bf16.mxu0 0
    %1012 = vmatpush1.bf16.msra.mxu0 %v816
    %1013 = vmatprep.subr.bf16.mxu0 0
    %1014 = vmatpush1.bf16.msra.mxu0 %v817
    %1015 = vmatprep.subr.bf16.mxu0 0
    %1016 = vmatpush1.bf16.msra.mxu0 %v818
    %1017 = vmatprep.subr.bf16.mxu0 0
    %1018 = vmatpush1.bf16.msra.mxu0 %v819
    %1019 = vmatprep.subr.bf16.mxu0 0
    %1020 = vmatpush1.bf16.msra.mxu0 %v820
    %1021 = vmatprep.subr.bf16.mxu0 0
    %1022 = vmatpush1.bf16.msra.mxu0 0
    %1023 = vmatprep.subr.bf16.mxu0 0
    %1024 = vmatpush1.bf16.msra.mxu0 0
    %1025 = vmatprep.subr.bf16.mxu0 0
    %1026 = vmatpush1.bf16.msra.mxu0 0
    %1027 = vmatprep.subr.bf16.mxu0 0
    %1028 = vmatpush1.bf16.msra.mxu0 0
    %1029 = vmatprep.subr.bf16.mxu0 0
    %1030 = vmatpush1.bf16.msra.mxu0 0
    %1031 = vmatprep.subr.bf16.mxu0 0
    %1032 = vmatpush1.bf16.msra.mxu0 0
    %1033 = vmatprep.subr.bf16.mxu0 0
    %1034 = vmatpush1.bf16.msra.mxu0 0
    %1035 = vmatprep.subr.bf16.mxu0 0
    %1036 = vmatpush1.bf16.msra.mxu0 0
    %1037 = vmatprep.mubr.bf16.mxu0 0
    %1038 = vmatmul.mubr.bf16.gmra.mrb[0].mxu0 %v1004
    %v1039 = vpop.f32.mrb[0].mxu0
    %v1040 = vadd.f32 0.0, %v1039
    %v1041 = vpop.f32.mrb[0].mxu0
    %v1042 = vpop.f32.mrb[0].mxu0
    %v1043 = vpop.f32.mrb[0].mxu0
    %1044 = vdwg.mxu0
    %v1045 = vadd.f32 %v1003, %v1040
    %v1046 = vtanh.pop %v1045
    %v1047 = vld [vmem:[#allocation3 + $0x14] sm:$0xf]
    %v1048 = vpack.c.bf16 %v1046, %v1046
    %1049 = vmatprep.subr.bf16.mxu0 0
    %1050 = vmatpush1.bf16.msra.mxu0 %v813
    %1051 = vmatprep.subr.bf16.mxu0 0
    %1052 = vmatpush1.bf16.msra.mxu0 %v814
    %1053 = vmatprep.subr.bf16.mxu0 0
    %1054 = vmatpush1.bf16.msra.mxu0 %v815
    %1055 = vmatprep.subr.bf16.mxu0 0
    %1056 = vmatpush1.bf16.msra.mxu0 %v816
    %1057 = vmatprep.subr.bf16.mxu0 0
    %1058 = vmatpush1.bf16.msra.mxu0 %v817
    %1059 = vmatprep.subr.bf16.mxu0 0
    %1060 = vmatpush1.bf16.msra.mxu0 %v818
    %1061 = vmatprep.subr.bf16.mxu0 0
    %1062 = vmatpush1.bf16.msra.mxu0 %v819
    %1063 = vmatprep.subr.bf16.mxu0 0
    %1064 = vmatpush1.bf16.msra.mxu0 %v820
    %1065 = vmatprep.subr.bf16.mxu0 0
    %1066 = vmatpush1.bf16.msra.mxu0 0
    %1067 = vmatprep.subr.bf16.mxu0 0
    %1068 = vmatpush1.bf16.msra.mxu0 0
    %1069 = vmatprep.subr.bf16.mxu0 0
    %1070 = vmatpush1.bf16.msra.mxu0 0
    %1071 = vmatprep.subr.bf16.mxu0 0
    %1072 = vmatpush1.bf16.msra.mxu0 0
    %1073 = vmatprep.subr.bf16.mxu0 0
    %1074 = vmatpush1.bf16.msra.mxu0 0
    %1075 = vmatprep.subr.bf16.mxu0 0
    %1076 = vmatpush1.bf16.msra.mxu0 0
    %1077 = vmatprep.subr.bf16.mxu0 0
    %1078 = vmatpush1.bf16.msra.mxu0 0
    %1079 = vmatprep.subr.bf16.mxu0 0
    %1080 = vmatpush1.bf16.msra.mxu0 0
    %1081 = vmatprep.mubr.bf16.mxu0 0
    %1082 = vmatmul.mubr.bf16.gmra.mrb[0].mxu0 %v1048
    %v1083 = vpop.f32.mrb[0].mxu0
    %v1084 = vadd.f32 0.0, %v1083
    %v1085 = vpop.f32.mrb[0].mxu0
    %v1086 = vpop.f32.mrb[0].mxu0
    %v1087 = vpop.f32.mrb[0].mxu0
    %1088 = vdwg.mxu0
    %v1089 = vadd.f32 %v1047, %v1084
    %v1090 = vtanh.pop %v1089
    %v1091 = vld [vmem:[#allocation3 + $0x18] sm:$0xf]
    %v1092 = vpack.c.bf16 %v1090, %v1090
    %1093 = vmatprep.subr.bf16.mxu0 0
    %1094 = vmatpush1.bf16.msra.mxu0 %v813
    %1095 = vmatprep.subr.bf16.mxu0 0
    %1096 = vmatpush1.bf16.msra.mxu0 %v814
    %1097 = vmatprep.subr.bf16.mxu0 0
    %1098 = vmatpush1.bf16.msra.mxu0 %v815
    %1099 = vmatprep.subr.bf16.mxu0 0
    %1100 = vmatpush1.bf16.msra.mxu0 %v816
    %1101 = vmatprep.subr.bf16.mxu0 0
    %1102 = vmatpush1.bf16.msra.mxu0 %v817
    %1103 = vmatprep.subr.bf16.mxu0 0
    %1104 = vmatpush1.bf16.msra.mxu0 %v818
    %1105 = vmatprep.subr.bf16.mxu0 0
    %1106 = vmatpush1.bf16.msra.mxu0 %v819
    %1107 = vmatprep.subr.bf16.mxu0 0
    %1108 = vmatpush1.bf16.msra.mxu0 %v820
    %1109 = vmatprep.subr.bf16.mxu0 0
    %1110 = vmatpush1.bf16.msra.mxu0 0
    %1111 = vmatprep.subr.bf16.mxu0 0
    %1112 = vmatpush1.bf16.msra.mxu0 0
    %1113 = vmatprep.subr.bf16.mxu0 0
    %1114 = vmatpush1.bf16.msra.mxu0 0
    %1115 = vmatprep.subr.bf16.mxu0 0
    %1116 = vmatpush1.bf16.msra.mxu0 0
    %1117 = vmatprep.subr.bf16.mxu0 0
    %1118 = vmatpush1.bf16.msra.mxu0 0
    %1119 = vmatprep.subr.bf16.mxu0 0
    %1120 = vmatpush1.bf16.msra.mxu0 0
    %1121 = vmatprep.subr.bf16.mxu0 0
    %1122 = vmatpush1.bf16.msra.mxu0 0
    %1123 = vmatprep.subr.bf16.mxu0 0
    %1124 = vmatpush1.bf16.msra.mxu0 0
    %1125 = vmatprep.mubr.bf16.mxu0 0
    %1126 = vmatmul.mubr.bf16.gmra.mrb[0].mxu0 %v1092
    %v1127 = vpop.f32.mrb[0].mxu0
    %v1128 = vadd.f32 0.0, %v1127
    %v1129 = vpop.f32.mrb[0].mxu0
    %v1130 = vpop.f32.mrb[0].mxu0
    %v1131 = vpop.f32.mrb[0].mxu0
    %1132 = vdwg.mxu0
    %v1133 = vadd.f32 %v1091, %v1128
    %v1134 = vtanh.pop %v1133
    %v1135 = vld [vmem:[#allocation3 + $0x1c] sm:$0xf]
    %v1136 = vpack.c.bf16 %v1134, %v1134
    %1137 = vmatprep.subr.bf16.mxu0 0
    %1138 = vmatpush1.bf16.msra.mxu0 %v813
    %1139 = vmatprep.subr.bf16.mxu0 0
    %1140 = vmatpush1.bf16.msra.mxu0 %v814
    %1141 = vmatprep.subr.bf16.mxu0 0
    %1142 = vmatpush1.bf16.msra.mxu0 %v815
    %1143 = vmatprep.subr.bf16.mxu0 0
    %1144 = vmatpush1.bf16.msra.mxu0 %v816
    %1145 = vmatprep.subr.bf16.mxu0 0
    %1146 = vmatpush1.bf16.msra.mxu0 %v817
    %1147 = vmatprep.subr.bf16.mxu0 0
    %1148 = vmatpush1.bf16.msra.mxu0 %v818
    %1149 = vmatprep.subr.bf16.mxu0 0
    %1150 = vmatpush1.bf16.msra.mxu0 %v819
    %1151 = vmatprep.subr.bf16.mxu0 0
    %1152 = vmatpush1.bf16.msra.mxu0 %v820
    %1153 = vmatprep.subr.bf16.mxu0 0
    %1154 = vmatpush1.bf16.msra.mxu0 0
    %1155 = vmatprep.subr.bf16.mxu0 0
    %1156 = vmatpush1.bf16.msra.mxu0 0
    %1157 = vmatprep.subr.bf16.mxu0 0
    %1158 = vmatpush1.bf16.msra.mxu0 0
    %1159 = vmatprep.subr.bf16.mxu0 0
    %1160 = vmatpush1.bf16.msra.mxu0 0
    %1161 = vmatprep.subr.bf16.mxu0 0
    %1162 = vmatpush1.bf16.msra.mxu0 0
    %1163 = vmatprep.subr.bf16.mxu0 0
    %1164 = vmatpush1.bf16.msra.mxu0 0
    %1165 = vmatprep.subr.bf16.mxu0 0
    %1166 = vmatpush1.bf16.msra.mxu0 0
    %1167 = vmatprep.subr.bf16.mxu0 0
    %1168 = vmatpush1.bf16.msra.mxu0 0
    %1169 = vmatprep.mubr.bf16.mxu0 0
    %1170 = vmatmul.mubr.bf16.gmra.mrb[0].mxu0 %v1136
    %v1171 = vpop.f32.mrb[0].mxu0
    %v1172 = vadd.f32 0.0, %v1171
    %v1173 = vpop.f32.mrb[0].mxu0
    %v1174 = vpop.f32.mrb[0].mxu0
    %v1175 = vpop.f32.mrb[0].mxu0
    %1176 = vdwg.mxu0
    %v1177 = vadd.f32 %v1135, %v1172
    %v1178 = vtanh.pop %v1177
    %v1179 = vpack.c.bf16 %v1178, %v1178
    %v1180 = vld [vmem:[#allocation12] sm:$0xf]
    %v1181 = vld [vmem:[#allocation12 + $0x4] sm:$0xf]
    %v1182 = vld [vmem:[#allocation12 + $0x8] sm:$0xf]
    %v1183 = vld [vmem:[#allocation12 + $0xc] sm:$0xf]
    %v1184 = vld [vmem:[#allocation12 + $0x10] sm:$0xf]
    %v1185 = vld [vmem:[#allocation12 + $0x14] sm:$0xf]
    %v1186 = vld [vmem:[#allocation12 + $0x18] sm:$0xf]
    %v1187 = vld [vmem:[#allocation12 + $0x1c] sm:$0xf]
    %v1188 = vld [vmem:[#allocation12 + $0x20] sm:$0xf]
    %v1189 = vld [vmem:[#allocation12 + $0x24] sm:$0xf]
    %v1190 = vld [vmem:[#allocation12 + $0x28] sm:$0xf]
    %v1191 = vld [vmem:[#allocation12 + $0x2c] sm:$0xf]
    %v1192 = vld [vmem:[#allocation12 + $0x30] sm:$0xf]
    %v1193 = vld [vmem:[#allocation12 + $0x34] sm:$0xf]
    %v1194 = vld [vmem:[#allocation12 + $0x38] sm:$0xf]
    %v1195 = vld [vmem:[#allocation12 + $0x3c] sm:$0xf]
    %v1196 = vld [vmem:[%s6] sm:$0x1]
    %v1198 = vlaneseq
    %v1199 = vshrl.u32 %v1198, 7
    %v1200 = vsub.s32 0, %v1199
    %v1201 = vrot.slane %v1196, %v1200
    %v1219 = vunpack.c.l.b16 %v1180
    %v1220 = vunpack.c.l.b16 %v1181
    %v1221 = vunpack.c.l.b16 %v1182
    %v1222 = vunpack.c.l.b16 %v1183
    %v1223 = vunpack.c.l.b16 %v1184
    %v1224 = vunpack.c.l.b16 %v1185
    %v1225 = vunpack.c.l.b16 %v1186
    %v1226 = vunpack.c.l.b16 %v1187
    %v1227 = vunpack.c.l.b16 %v1188
    %v1228 = vunpack.c.l.b16 %v1189
    %v1229 = vunpack.c.l.b16 %v1190
    %v1230 = vunpack.c.l.b16 %v1191
    %v1231 = vunpack.c.l.b16 %v1192
    %v1232 = vunpack.c.l.b16 %v1193
    %v1233 = vunpack.c.l.b16 %v1194
    %v1234 = vunpack.c.l.b16 %v1195
    %v1235 = vpack.c.b16 %v1220, %v1219
    %v1236 = vpack.c.b16 %v1222, %v1221
    %v1237 = vpack.c.b16 %v1224, %v1223
    %v1238 = vpack.c.b16 %v1226, %v1225
    %v1239 = vpack.c.b16 %v1228, %v1227
    %v1240 = vpack.c.b16 %v1230, %v1229
    %v1241 = vpack.c.b16 %v1232, %v1231
    %v1242 = vpack.c.b16 %v1234, %v1233
    %1251 = vmatprep.subr.bf16.mxu0 0
    %1252 = vmatpush1.bf16.msra.mxu0 %v1235
    %1253 = vmatprep.subr.bf16.mxu0 0
    %1254 = vmatpush1.bf16.msra.mxu0 %v1236
    %1255 = vmatprep.subr.bf16.mxu0 0
    %1256 = vmatpush1.bf16.msra.mxu0 %v1237
    %1257 = vmatprep.subr.bf16.mxu0 0
    %1258 = vmatpush1.bf16.msra.mxu0 %v1238
    %1259 = vmatprep.subr.bf16.mxu0 0
    %1260 = vmatpush1.bf16.msra.mxu0 %v1239
    %1261 = vmatprep.subr.bf16.mxu0 0
    %1262 = vmatpush1.bf16.msra.mxu0 %v1240
    %1263 = vmatprep.subr.bf16.mxu0 0
    %1264 = vmatpush1.bf16.msra.mxu0 %v1241
    %1265 = vmatprep.subr.bf16.mxu0 0
    %1266 = vmatpush1.bf16.msra.mxu0 %v1242
    %1267 = vmatprep.subr.bf16.mxu0 0
    %1268 = vmatpush1.bf16.msra.mxu0 0
    %1269 = vmatprep.subr.bf16.mxu0 0
    %1270 = vmatpush1.bf16.msra.mxu0 0
    %1271 = vmatprep.subr.bf16.mxu0 0
    %1272 = vmatpush1.bf16.msra.mxu0 0
    %1273 = vmatprep.subr.bf16.mxu0 0
    %1274 = vmatpush1.bf16.msra.mxu0 0
    %1275 = vmatprep.subr.bf16.mxu0 0
    %1276 = vmatpush1.bf16.msra.mxu0 0
    %1277 = vmatprep.subr.bf16.mxu0 0
    %1278 = vmatpush1.bf16.msra.mxu0 0
    %1279 = vmatprep.subr.bf16.mxu0 0
    %1280 = vmatpush1.bf16.msra.mxu0 0
    %1281 = vmatprep.subr.bf16.mxu0 0
    %1282 = vmatpush1.bf16.msra.mxu0 0
    %1283 = vmatprep.mubr.bf16.mxu0 0
    %1284 = vmatmul.mubr.bf16.gmra.mrb[0].mxu0 %v1179
    %v1285 = vpop.f32.mrb[0].mxu0
    %v1286 = vadd.f32 %v1201, %v1285
    %v1287 = vpop.f32.mrb[0].mxu0
    %v1288 = vpop.f32.mrb[0].mxu0
    %v1289 = vpop.f32.mrb[0].mxu0
    %1290 = vdwg.mxu0
    %1291 = vst [vmem:[#allocation13] sm:$0xf] %v1286
    // Predicated region
    $region50: #{tpu_custom_call.1} parent=1 // pred_check
      _
    $region51: #{tpu_custom_call.1} parent=1 // pred_check_branch
      %1293 = sbr.rel (0) target = $region53
    $region52: #{tpu_custom_call.1} parent=1 // pred_region
      %s1295 = ssub.s32 64, 64
      %1296 = vsyncadd [#allocation6], %s1295
      %s1298 = sshll.u32 [#allocation13], 4
      %s1299 = int_to_ptr.vmem [resolvable:$true] %s1298
      %1301 = dma.vmem_to_hbm [thread:$0]  %s1299, 64, %s7, [#allocation6]
    $region53: #{tpu_custom_call.1} parent=1 // pred_fallthru
      _
    // Predicated region
    $region54: #{tpu_custom_call.1} parent=1 // pred_check
      _
    $region55: #{tpu_custom_call.1} parent=1 // pred_check_branch
      %1303 = sbr.rel (0) target = $region57
    $region56: #{tpu_custom_call.1} parent=1 // pred_region
      %1304 = dma.done [#allocation6], 64
    $region57: #{tpu_custom_call.1} parent=1 // pred_fallthru
      _
    %1305 = vsyncpa [#allocation5], 1
    %1306 = vsyncpa [#allocation8], 1
    %1307 = vsyncpa [#allocation11], 1
    %1308 = vsyncpa [#allocation6], 1

</llo_original>
